<compile_context>
chip_gen: v6e
topology: v6e:2x2x1
jax: 0.10.0
libtpu: 0.0.40
codegen_flags: <defaults>
</compile_context>

<pallas_src>
import functools

import jax
import jax.numpy as jnp
import numpy as np
from jax.experimental import pallas as pl
from jax.experimental.pallas import tpu as pltpu

_LANE = 128
_GATHER_ROWS_PER_STEP = 128   # rows per manual-DMA chunk (multiple of 128 so the
                              # per-chunk token->batch map is a lane-dense block)
_MAX_STREAM_TILE = 4096       # vocab rows per streamed tile when V is large


def _round_up(x, m):
    return (x + m - 1) // m * m


def _pad_axis(x, axis, multiple, value=0.0):
    size = x.shape[axis]
    pad = (-size) % multiple
    if pad == 0:
        return x
    widths = [(0, 0)] * x.ndim
    widths[axis] = (0, pad)
    return jnp.pad(x, widths, constant_values=value)


# ---------------------------------------------------------------------------
# Shared MLP / BatchNorm / BCE head (runs once, on the last grid step).
# Padding is mathematically inert: padded hidden channels stay exactly 0
# through Linear/BN/ReLU (gamma padded with 1, beta/b1 with 0) and padded
# w2 rows contribute nothing to the logit.
# ---------------------------------------------------------------------------
def _mlp_head(bow, w1t, b1, gamma, beta, w2t, b2, t):
    # fc_hidden (w1t stored bf16; upcast so the tiny epilogue matmul stays f32)
    h = jnp.dot(bow, w1t.astype(jnp.float32),
                preferred_element_type=jnp.float32) + b1
    # BatchNorm1d, training-mode batch statistics (biased var, eps=1e-5)
    mu = jnp.mean(h, axis=0, keepdims=True)
    var = jnp.mean((h - mu) ** 2, axis=0, keepdims=True)
    h = (h - mu) * jax.lax.rsqrt(var + 1e-5) * gamma + beta
    # ReLU; Dropout(p=0.5) is the eval-mode identity.
    h = jnp.maximum(h, 0.0)
    # fc_output
    z = jnp.dot(h, w2t.astype(jnp.float32),
                preferred_element_type=jnp.float32) + b2          # (B, 1)
    # BCEWithLogitsLoss(z[:, 0], t), mean reduction (numerically stable)
    per_ex = jnp.maximum(z, 0.0) - z * t + jnp.log1p(jnp.exp(-jnp.abs(z)))
    return z, jnp.reshape(jnp.mean(per_ex), (1, 1))


# ---------------------------------------------------------------------------
# Path A: full-table streaming (small vocab).  Grid reduces over vocab tiles;
# with a small vocab it collapses to a single step (no per-step overhead).
# ---------------------------------------------------------------------------
def _bow_stream_kernel(ids_ref, emb_ref, w1t_ref, b1_ref, gamma_ref, beta_ref,
                       w2t_ref, b2_ref, t_ref, logits_ref, loss_ref, bow_acc):
    v_idx = pl.program_id(0)

    @pl.when(v_idx == 0)
    def _init():
        bow_acc[...] = jnp.zeros_like(bow_acc)

    ids = ids_ref[...]                       # (B, L) int32
    B, L = ids.shape
    TV = emb_ref.shape[0]

    # Per-tile token counts, built with L VPU compares (no 3D one-hot tensor).
    v0 = v_idx * TV
    vocab_ids = v0 + jax.lax.broadcasted_iota(jnp.int32, (B, TV), 1)
    counts = jnp.zeros((B, TV), jnp.float32)
    for l in range(L):                       # L is small & static -> unrolled
        counts = counts + (ids[:, l:l + 1] == vocab_ids).astype(jnp.float32)
    # counts are small integers; bf16 is exact only up to 256, so keep the fast
    # bf16 MXU path only when it is exact and fall back to f32 otherwise.
    if L <= 256:
        counts = counts.astype(jnp.bfloat16)

    # Partial bag-of-words: counts @ emb_tile (bf16 in, f32 accumulate).
    bow_acc[...] += jnp.dot(counts, emb_ref[...],
                            preferred_element_type=jnp.float32)

    @pl.when(v_idx == pl.num_programs(0) - 1)
    def _finalize():
        bow = bow_acc[...] * jnp.float32(1.0 / L)                     # (B, Hp)
        z, loss = _mlp_head(bow, w1t_ref[...], b1_ref[...], gamma_ref[...],
                            beta_ref[...], w2t_ref[...], b2_ref[...], t_ref[...])
        logits_ref[...] = z
        loss_ref[...] = loss


# ---------------------------------------------------------------------------
# Path B: ids-driven row gather (large vocab).  emb stays in HBM; each grid
# step manually DMAs _GATHER_ROWS_PER_STEP referenced rows into a
# double-buffered VMEM slab, with the next chunk's DMAs issued before waiting
# on the current chunk.
# ---------------------------------------------------------------------------
def _make_gather_kernel(inv_len):
    def kernel(ids_ref, tok2b_ref, emb_hbm, w1t_ref, b1_ref, gamma_ref,
               beta_ref, w2t_ref, b2_ref, t_ref, logits_ref, loss_ref,
               row_buf, dma_sem, bow_acc):
        c = pl.program_id(0)
        n_chunks = pl.num_programs(0)
        _, R, Hp = row_buf.shape
        B = bow_acc.shape[0]

        def start_chunk(chunk, slot):
            base = chunk * R

            @pl.loop(0, R)
            def _(r):
                tok = ids_ref[base + r]          # SMEM read (before any .wait())
                pltpu.make_async_copy(emb_hbm.at[pl.ds(tok, 1), :],
                                      row_buf.at[slot, pl.ds(r, 1), :],
                                      dma_sem.at[slot]).start()

        def wait_chunk(slot):
            # One wait per issued row copy; only the descriptor *size* matters
            # for the semaphore accounting, so a fixed-src (1, Hp) copy is used.
            @pl.loop(0, R)
            def _(r):
                pltpu.make_async_copy(emb_hbm.at[pl.ds(0, 1), :],
                                      row_buf.at[slot, pl.ds(r, 1), :],
                                      dma_sem.at[slot]).wait()

        @pl.when(c == 0)
        def _prologue():
            bow_acc[...] = jnp.zeros_like(bow_acc)
            start_chunk(0, 0)

        slot = c % 2

        @pl.when(c + 1 < n_chunks)               # prefetch next chunk first
        def _prefetch():
            start_chunk(c + 1, (c + 1) % 2)

        wait_chunk(slot)

        # Fold this chunk into bow: onehot(batch index of token) @ rows (MXU,
        # exact {0,1} matrix, f32 accumulate).  Padding tokens have tok2b = -1
        # and match no batch row, so they contribute nothing.
        b_of_tok = tok2b_ref[...]                                    # (1, R)
        b_iota = jax.lax.broadcasted_iota(jnp.int32, (B, R), 0)
        sel = (b_of_tok == b_iota).astype(jnp.bfloat16)              # (B, R)
        bow_acc[...] += jnp.dot(sel, row_buf[slot],
                                preferred_element_type=jnp.float32)

        @pl.when(c == n_chunks - 1)
        def _finalize():
            bow = bow_acc[...] * jnp.float32(inv_len)
            z, loss = _mlp_head(bow, w1t_ref[...], b1_ref[...], gamma_ref[...],
                                beta_ref[...], w2t_ref[...], b2_ref[...],
                                t_ref[...])
            logits_ref[...] = z
            loss_ref[...] = loss

    return kernel


# ---------------------------------------------------------------------------
# Wrappers
# ---------------------------------------------------------------------------
def _prepare_params(emb, w1, b1, gamma, beta, w2, b2, t, B, vocab_multiple):
    V, H = emb.shape
    # emb: bf16 (dominant HBM traffic), hidden padded to a lane multiple,
    # vocab padded to the requested multiple.
    emb_p = _pad_axis(_pad_axis(jnp.asarray(emb, jnp.float32), 1, _LANE),
                      0, vocab_multiple).astype(jnp.bfloat16)         # (Vp, Hp)
    # Linear weights transposed to (in, out), padded, stored in bf16.
    w1t = _pad_axis(_pad_axis(jnp.asarray(w1, jnp.float32).T, 0, _LANE),
                    1, _LANE).astype(jnp.bfloat16)                    # (Hp, Hp)
    b1_ = _pad_axis(jnp.asarray(b1, jnp.float32).reshape(1, H), 1, _LANE)
    g_ = _pad_axis(jnp.asarray(gamma, jnp.float32).reshape(1, H), 1, _LANE,
                   value=1.0)
    be_ = _pad_axis(jnp.asarray(beta, jnp.float32).reshape(1, H), 1, _LANE)
    w2t = _pad_axis(jnp.asarray(w2, jnp.float32).T, 0, _LANE).astype(jnp.bfloat16)
    b2_ = jnp.asarray(b2, jnp.float32).reshape(1, 1)
    t_ = jnp.asarray(t, jnp.float32).reshape(B, 1)
    return emb_p, w1t, b1_, g_, be_, w2t, b2_, t_


def _bow_forward_stream(ids, emb, w1, b1, gamma, beta, w2, b2, t):
    B, L = ids.shape
    V, H = emb.shape
    Hp = _round_up(H, _LANE)
    # Single full-table tile when the vocab is small; otherwise 4096-row tiles.
    if V <= _MAX_STREAM_TILE:
        tv = _round_up(V, 16)          # 16 = bf16 sublane-packing multiple
    else:
        tv = _MAX_STREAM_TILE
    emb_p, w1t, b1_, g_, be_, w2t, b2_, t_ = _prepare_params(
        emb, w1, b1, gamma, beta, w2, b2, t, B, vocab_multiple=tv)
    Vp = emb_p.shape[0]
    ids_ = jnp.asarray(ids, jnp.int32)

    # VMEM (worst case, tv=4096, Hp=128): emb double-buffer 2*tv*Hp*2 = 2 MiB
    # + w1t 2*Hp*Hp*2 = 64 KiB + small params + bow_acc B*Hp*4.  Far under the
    # 32 MiB scoped default of every generation (incl. v7x's 64 MiB physical).
    logits, loss = pl.pallas_call(
        _bow_stream_kernel,
        out_shape=(jax.ShapeDtypeStruct((B, 1), jnp.float32),
                   jax.ShapeDtypeStruct((1, 1), jnp.float32)),
        grid_spec=pltpu.PrefetchScalarGridSpec(
            num_scalar_prefetch=0,
            grid=(Vp // tv,),
            in_specs=[
                pl.BlockSpec((B, L), lambda v: (0, 0)),        # ids (resident)
                pl.BlockSpec((tv, Hp), lambda v: (v, 0)),      # emb tile (bf16)
                pl.BlockSpec((Hp, Hp), lambda v: (0, 0)),      # w1t (bf16)
                pl.BlockSpec((1, Hp), lambda v: (0, 0)),       # b1
                pl.BlockSpec((1, Hp), lambda v: (0, 0)),       # gamma
                pl.BlockSpec((1, Hp), lambda v: (0, 0)),       # beta
                pl.BlockSpec((Hp, 1), lambda v: (0, 0)),       # w2t (bf16)
                pl.BlockSpec((1, 1), lambda v: (0, 0)),        # b2
                pl.BlockSpec((B, 1), lambda v: (0, 0)),        # targets
            ],
            out_specs=(pl.BlockSpec((B, 1), lambda v: (0, 0)),
                       pl.BlockSpec((1, 1), lambda v: (0, 0))),
            scratch_shapes=[pltpu.VMEM((B, Hp), jnp.float32)],  # bow accumulator
        ),
        compiler_params=pltpu.CompilerParams(
            dimension_semantics=("arbitrary",),   # V is a reduction axis
            vmem_limit_bytes=32 * 1024 * 1024,
        ),
    )(ids_, emb_p, w1t, b1_, g_, be_, w2t, b2_, t_)
    return loss[0, 0], logits[:, 0]


def _bow_forward_gather(ids, emb, w1, b1, gamma, beta, w2, b2, t):
    B, L = ids.shape
    V, H = emb.shape
    Hp = _round_up(H, _LANE)
    R = _GATHER_ROWS_PER_STEP
    T = B * L
    Tp = _round_up(T, R)
    n_chunks = Tp // R

    emb_p, w1t, b1_, g_, be_, w2t, b2_, t_ = _prepare_params(
        emb, w1, b1, gamma, beta, w2, b2, t, B, vocab_multiple=16)

    # Flattened token ids drive the row gather (scalar-prefetched into SMEM).
    # Padding tokens point at row 0 but are masked out via tok2b = -1.
    ids_flat = jnp.pad(jnp.asarray(ids, jnp.int32).reshape(-1), (0, Tp - T))
    tok2b = jnp.pad(jnp.arange(T, dtype=jnp.int32) // L, (0, Tp - T),
                    constant_values=-1).reshape(1, Tp)

    # VMEM: row slab 2*R*Hp*2 = 64 KiB + params (double-buffered, <200 KiB)
    # + bow_acc B*Hp*4 -- trivially inside every generation's budget.
    logits, loss = pl.pallas_call(
        _make_gather_kernel(1.0 / L),
        out_shape=(jax.ShapeDtypeStruct((B, 1), jnp.float32),
                   jax.ShapeDtypeStruct((1, 1), jnp.float32)),
        grid_spec=pltpu.PrefetchScalarGridSpec(
            num_scalar_prefetch=1,                 # ids -> SMEM
            grid=(n_chunks,),
            in_specs=[
                pl.BlockSpec((1, R), lambda c, ids: (0, c)),    # token->batch map
                pl.BlockSpec(memory_space=pl.ANY),              # emb stays in HBM
                pl.BlockSpec((Hp, Hp), lambda c, ids: (0, 0)),  # w1t (bf16)
                pl.BlockSpec((1, Hp), lambda c, ids: (0, 0)),   # b1
                pl.BlockSpec((1, Hp), lambda c, ids: (0, 0)),   # gamma
                pl.BlockSpec((1, Hp), lambda c, ids: (0, 0)),   # beta
                pl.BlockSpec((Hp, 1), lambda c, ids: (0, 0)),   # w2t (bf16)
                pl.BlockSpec((1, 1), lambda c, ids: (0, 0)),    # b2
                pl.BlockSpec((B, 1), lambda c, ids: (0, 0)),    # targets
            ],
            out_specs=(pl.BlockSpec((B, 1), lambda c, ids: (0, 0)),
                       pl.BlockSpec((1, 1), lambda c, ids: (0, 0))),
            scratch_shapes=[
                pltpu.VMEM((2, R, Hp), jnp.bfloat16),   # double-buffered rows
                pltpu.SemaphoreType.DMA((2,)),          # one DMA sem per slot
                pltpu.VMEM((B, Hp), jnp.float32),       # bow accumulator
            ],
        ),
        compiler_params=pltpu.CompilerParams(
            dimension_semantics=("arbitrary",),         # chunk axis is a reduction
            vmem_limit_bytes=32 * 1024 * 1024,
        ),
    )(ids_flat, tok2b, emb_p, w1t, b1_, g_, be_, w2t, b2_, t_)
    return loss[0, 0], logits[:, 0]


def bow_forward(ids, emb, w1, b1, gamma, beta, w2, b2, t, *, mode="auto"):
    """ids: (B, L) int32; returns (loss scalar, logits (B,)) like the PyTorch module."""
    B, L = ids.shape
    V, _ = emb.shape
    if mode == "auto":
        # Row gather only pays once the table is much larger than the B*L
        # referenced rows (per-row DMAs are small); otherwise stream the table.
        mode = ("gather"
                if V >= 8 * _round_up(B * L, _GATHER_ROWS_PER_STEP)
                else "stream")
    if mode == "gather":
        return _bow_forward_gather(ids, emb, w1, b1, gamma, beta, w2, b2, t)
    return _bow_forward_stream(ids, emb, w1, b1, gamma, beta, w2, b2, t)


def reference_forward(ids, emb, w1, b1, gamma, beta, w2, b2, t):
    """Pure-JAX reference mirroring the PyTorch forward (eval-mode dropout)."""
    bow = jnp.mean(emb[ids], axis=1)                                    # (B, H)
    h = bow @ w1.T + b1
    mu = jnp.mean(h, axis=0, keepdims=True)
    var = jnp.mean((h - mu) ** 2, axis=0, keepdims=True)
    h = (h - mu) / jnp.sqrt(var + 1e-5) * gamma + beta
    h = jnp.maximum(h, 0.0)
    z = (h @ w2.T + b2)[:, 0]
    tt = t.astype(jnp.float32)
    per = jnp.maximum(z, 0.0) - z * tt + jnp.log1p(jnp.exp(-jnp.abs(z)))
    return jnp.mean(per), z


if __name__ == "__main__":
    V, H = 1000, 96    # vocab_size, no_of_hidden_units (H exercises pad-to-128,
                       # V exercises vocab padding)
    B, L = 8, 32       # batch, tokens per review (B*L=256 -> 2 gather chunks)

    key = jax.random.PRNGKey(0)
    k_ids, k_emb, k_w1, k_b1, k_w2, k_b2, k_t = jax.random.split(key, 7)

    ids = jax.random.randint(k_ids, (B, L), 0, V, dtype=jnp.int32)
    t = jax.random.bernoulli(k_t, 0.5, (B,)).astype(jnp.float32)

    # The kernels store/stream emb, w1, w2 in bf16; round them once here so the
    # kernels and the f32 reference see identical parameter values.
    def _bf16_round(x):
        return x.astype(jnp.bfloat16).astype(jnp.float32)

    emb = _bf16_round(jax.random.normal(k_emb, (V, H), jnp.float32))
    lim1 = 1.0 / np.sqrt(H)
    w1 = _bf16_round(jax.random.uniform(k_w1, (H, H), jnp.float32, -lim1, lim1))
    b1 = jax.random.uniform(k_b1, (H,), jnp.float32, -lim1, lim1)
    w2 = _bf16_round(jax.random.uniform(k_w2, (1, H), jnp.float32, -lim1, lim1))
    b2 = jax.random.uniform(k_b2, (1,), jnp.float32, -lim1, lim1)
    gamma = jnp.ones((H,), jnp.float32)
    beta = jnp.zeros((H,), jnp.float32)

    ref_loss, ref_logits = reference_forward(ids, emb, w1, b1, gamma, beta, w2, b2, t)

    # Path A: full-table streaming (what "auto" picks at this vocab size:
    # a single grid step with the whole bf16 table as one tile).
    loss_s, logits_s = bow_forward(ids, emb, w1, b1, gamma, beta, w2, b2, t, mode="auto")
    logits_s = jax.block_until_ready(logits_s)
    np.testing.assert_allclose(np.asarray(logits_s), np.asarray(ref_logits),
                               rtol=1e-4, atol=1e-4)
    np.testing.assert_allclose(np.asarray(loss_s), np.asarray(ref_loss),
                               rtol=1e-4, atol=1e-4)

    # Path B: ids-driven row gather (what "auto" picks for realistic 30k-100k
    # vocabularies); forced here so both kernels are exercised on-device.
    loss_g, logits_g = bow_forward(ids, emb, w1, b1, gamma, beta, w2, b2, t, mode="gather")
    logits_g = jax.block_until_ready(logits_g)
    np.testing.assert_allclose(np.asarray(logits_g), np.asarray(ref_logits),
                               rtol=1e-4, atol=1e-4)
    np.testing.assert_allclose(np.asarray(loss_g), np.asarray(ref_loss),
                               rtol=1e-4, atol=1e-4)

    print("KERNEL_OK")
</pallas_src>

<mosaic_0001>
module attributes {stable_mosaic.version = 11 : i64} {
  func.func @_bow_stream_kernel(%arg0: i32, %arg1: memref<8x32xi32, #tpu.memory_space<vmem>>, %arg2: memref<1008x128xbf16, #tpu.memory_space<vmem>>, %arg3: memref<128x128xbf16, #tpu.memory_space<vmem>>, %arg4: memref<1x128xf32, #tpu.memory_space<vmem>>, %arg5: memref<1x128xf32, #tpu.memory_space<vmem>>, %arg6: memref<1x128xf32, #tpu.memory_space<vmem>>, %arg7: memref<128x1xbf16, #tpu.memory_space<vmem>>, %arg8: memref<1x1xf32, #tpu.memory_space<vmem>>, %arg9: memref<8x1xf32, #tpu.memory_space<vmem>>, %arg10: memref<8x1xf32, #tpu.memory_space<vmem>>, %arg11: memref<1x1xf32, #tpu.memory_space<vmem>>, %arg12: memref<8x128xf32, #tpu.memory_space<vmem>>) attributes {dimension_semantics = [#tpu.dimension_semantics<arbitrary>], iteration_bounds = array<i64: 1>, scalar_prefetch = 0 : i64, scratch_operands = 1 : i64, tpu.core_type = #tpu.core_type<tc>, window_params = [{pipeline_mode = #tpu.pipeline_mode<synchronous>, transform_indices = @transform_0, window_bounds = array<i64: 8, 32>}, {transform_indices = @transform_1, window_bounds = array<i64: 1008, 128>}, {pipeline_mode = #tpu.pipeline_mode<synchronous>, transform_indices = @transform_2, window_bounds = array<i64: 128, 128>}, {pipeline_mode = #tpu.pipeline_mode<synchronous>, transform_indices = @transform_3, window_bounds = array<i64: 1, 128>}, {pipeline_mode = #tpu.pipeline_mode<synchronous>, transform_indices = @transform_4, window_bounds = array<i64: 1, 128>}, {pipeline_mode = #tpu.pipeline_mode<synchronous>, transform_indices = @transform_5, window_bounds = array<i64: 1, 128>}, {pipeline_mode = #tpu.pipeline_mode<synchronous>, transform_indices = @transform_6, window_bounds = array<i64: 128, 1>}, {pipeline_mode = #tpu.pipeline_mode<synchronous>, transform_indices = @transform_7, window_bounds = array<i64: 1, 1>}, {pipeline_mode = #tpu.pipeline_mode<synchronous>, transform_indices = @transform_8, window_bounds = array<i64: 8, 1>}, {pipeline_mode = #tpu.pipeline_mode<synchronous>, transform_indices = @transform_9, window_bounds = array<i64: 8, 1>}, {pipeline_mode = #tpu.pipeline_mode<synchronous>, transform_indices = @transform_10, window_bounds = array<i64: 1, 1>}]} {
    %c0_i32 = arith.constant 0 : i32
    %0 = arith.cmpi eq, %arg0, %c0_i32 : i32
    %1 = arith.extui %0 : i1 to i32
    %c0_i32_0 = arith.constant 0 : i32
    %2 = arith.cmpi ne, %1, %c0_i32_0 : i32
    scf.if %2 {
      %cst_11 = arith.constant 0.000000e+00 : f32
      %210 = vector.broadcast %cst_11 : f32 to vector<8x128xf32>
      %c0_12 = arith.constant 0 : index
      %c0_13 = arith.constant 0 : index
      %211 = vector.load %arg12[%c0_12, %c0_13] : memref<8x128xf32, #tpu.memory_space<vmem>>, vector<8x128xf32>
      tpu.vector_store %arg12[%c0_12, %c0_13], %210 {strides = array<i32>} : memref<8x128xf32, #tpu.memory_space<vmem>>, vector<8x128xf32>,
    } else {
    }
    %c0 = arith.constant 0 : index
    %c0_1 = arith.constant 0 : index
    %3 = vector.load %arg1[%c0, %c0_1] : memref<8x32xi32, #tpu.memory_space<vmem>>, vector<8x32xi32>
    %c1008_i32 = arith.constant 1008 : i32
    %4 = arith.muli %arg0, %c1008_i32 : i32
    %5 = tpu.iota {dimensions = array<i32: 1>} : vector<8x1008xi32>
    %6 = vector.broadcast %4 : i32 to vector<8x1008xi32>
    %7 = arith.addi %6, %5 : vector<8x1008xi32>
    %cst = arith.constant 0.000000e+00 : f32
    %8 = vector.broadcast %cst : f32 to vector<8x1008xf32>
    %9 = vector.extract_strided_slice %3 {offsets = [0, 0], sizes = [8, 1], strides = [1, 1]} : vector<8x32xi32> to vector<8x1xi32>
    %10 = vector.broadcast %9 : vector<8x1xi32> to vector<8x1008xi32>
    %11 = arith.cmpi eq, %10, %7 : vector<8x1008xi32>
    %12 = arith.extui %11 : vector<8x1008xi1> to vector<8x1008xi32>
    %13 = arith.sitofp %12 : vector<8x1008xi32> to vector<8x1008xf32>
    %14 = arith.addf %8, %13 : vector<8x1008xf32>
    %15 = vector.extract_strided_slice %3 {offsets = [0, 1], sizes = [8, 1], strides = [1, 1]} : vector<8x32xi32> to vector<8x1xi32>
    %16 = vector.broadcast %15 : vector<8x1xi32> to vector<8x1008xi32>
    %17 = arith.cmpi eq, %16, %7 : vector<8x1008xi32>
    %18 = arith.extui %17 : vector<8x1008xi1> to vector<8x1008xi32>
    %19 = arith.sitofp %18 : vector<8x1008xi32> to vector<8x1008xf32>
    %20 = arith.addf %14, %19 : vector<8x1008xf32>
    %21 = vector.extract_strided_slice %3 {offsets = [0, 2], sizes = [8, 1], strides = [1, 1]} : vector<8x32xi32> to vector<8x1xi32>
    %22 = vector.broadcast %21 : vector<8x1xi32> to vector<8x1008xi32>
    %23 = arith.cmpi eq, %22, %7 : vector<8x1008xi32>
    %24 = arith.extui %23 : vector<8x1008xi1> to vector<8x1008xi32>
    %25 = arith.sitofp %24 : vector<8x1008xi32> to vector<8x1008xf32>
    %26 = arith.addf %20, %25 : vector<8x1008xf32>
    %27 = vector.extract_strided_slice %3 {offsets = [0, 3], sizes = [8, 1], strides = [1, 1]} : vector<8x32xi32> to vector<8x1xi32>
    %28 = vector.broadcast %27 : vector<8x1xi32> to vector<8x1008xi32>
    %29 = arith.cmpi eq, %28, %7 : vector<8x1008xi32>
    %30 = arith.extui %29 : vector<8x1008xi1> to vector<8x1008xi32>
    %31 = arith.sitofp %30 : vector<8x1008xi32> to vector<8x1008xf32>
    %32 = arith.addf %26, %31 : vector<8x1008xf32>
    %33 = vector.extract_strided_slice %3 {offsets = [0, 4], sizes = [8, 1], strides = [1, 1]} : vector<8x32xi32> to vector<8x1xi32>
    %34 = vector.broadcast %33 : vector<8x1xi32> to vector<8x1008xi32>
    %35 = arith.cmpi eq, %34, %7 : vector<8x1008xi32>
    %36 = arith.extui %35 : vector<8x1008xi1> to vector<8x1008xi32>
    %37 = arith.sitofp %36 : vector<8x1008xi32> to vector<8x1008xf32>
    %38 = arith.addf %32, %37 : vector<8x1008xf32>
    %39 = vector.extract_strided_slice %3 {offsets = [0, 5], sizes = [8, 1], strides = [1, 1]} : vector<8x32xi32> to vector<8x1xi32>
    %40 = vector.broadcast %39 : vector<8x1xi32> to vector<8x1008xi32>
    %41 = arith.cmpi eq, %40, %7 : vector<8x1008xi32>
    %42 = arith.extui %41 : vector<8x1008xi1> to vector<8x1008xi32>
    %43 = arith.sitofp %42 : vector<8x1008xi32> to vector<8x1008xf32>
    %44 = arith.addf %38, %43 : vector<8x1008xf32>
    %45 = vector.extract_strided_slice %3 {offsets = [0, 6], sizes = [8, 1], strides = [1, 1]} : vector<8x32xi32> to vector<8x1xi32>
    %46 = vector.broadcast %45 : vector<8x1xi32> to vector<8x1008xi32>
    %47 = arith.cmpi eq, %46, %7 : vector<8x1008xi32>
    %48 = arith.extui %47 : vector<8x1008xi1> to vector<8x1008xi32>
    %49 = arith.sitofp %48 : vector<8x1008xi32> to vector<8x1008xf32>
    %50 = arith.addf %44, %49 : vector<8x1008xf32>
    %51 = vector.extract_strided_slice %3 {offsets = [0, 7], sizes = [8, 1], strides = [1, 1]} : vector<8x32xi32> to vector<8x1xi32>
    %52 = vector.broadcast %51 : vector<8x1xi32> to vector<8x1008xi32>
    %53 = arith.cmpi eq, %52, %7 : vector<8x1008xi32>
    %54 = arith.extui %53 : vector<8x1008xi1> to vector<8x1008xi32>
    %55 = arith.sitofp %54 : vector<8x1008xi32> to vector<8x1008xf32>
    %56 = arith.addf %50, %55 : vector<8x1008xf32>
    %57 = vector.extract_strided_slice %3 {offsets = [0, 8], sizes = [8, 1], strides = [1, 1]} : vector<8x32xi32> to vector<8x1xi32>
    %58 = vector.broadcast %57 : vector<8x1xi32> to vector<8x1008xi32>
    %59 = arith.cmpi eq, %58, %7 : vector<8x1008xi32>
    %60 = arith.extui %59 : vector<8x1008xi1> to vector<8x1008xi32>
    %61 = arith.sitofp %60 : vector<8x1008xi32> to vector<8x1008xf32>
    %62 = arith.addf %56, %61 : vector<8x1008xf32>
    %63 = vector.extract_strided_slice %3 {offsets = [0, 9], sizes = [8, 1], strides = [1, 1]} : vector<8x32xi32> to vector<8x1xi32>
    %64 = vector.broadcast %63 : vector<8x1xi32> to vector<8x1008xi32>
    %65 = arith.cmpi eq, %64, %7 : vector<8x1008xi32>
    %66 = arith.extui %65 : vector<8x1008xi1> to vector<8x1008xi32>
    %67 = arith.sitofp %66 : vector<8x1008xi32> to vector<8x1008xf32>
    %68 = arith.addf %62, %67 : vector<8x1008xf32>
    %69 = vector.extract_strided_slice %3 {offsets = [0, 10], sizes = [8, 1], strides = [1, 1]} : vector<8x32xi32> to vector<8x1xi32>
    %70 = vector.broadcast %69 : vector<8x1xi32> to vector<8x1008xi32>
    %71 = arith.cmpi eq, %70, %7 : vector<8x1008xi32>
    %72 = arith.extui %71 : vector<8x1008xi1> to vector<8x1008xi32>
    %73 = arith.sitofp %72 : vector<8x1008xi32> to vector<8x1008xf32>
    %74 = arith.addf %68, %73 : vector<8x1008xf32>
    %75 = vector.extract_strided_slice %3 {offsets = [0, 11], sizes = [8, 1], strides = [1, 1]} : vector<8x32xi32> to vector<8x1xi32>
    %76 = vector.broadcast %75 : vector<8x1xi32> to vector<8x1008xi32>
    %77 = arith.cmpi eq, %76, %7 : vector<8x1008xi32>
    %78 = arith.extui %77 : vector<8x1008xi1> to vector<8x1008xi32>
    %79 = arith.sitofp %78 : vector<8x1008xi32> to vector<8x1008xf32>
    %80 = arith.addf %74, %79 : vector<8x1008xf32>
    %81 = vector.extract_strided_slice %3 {offsets = [0, 12], sizes = [8, 1], strides = [1, 1]} : vector<8x32xi32> to vector<8x1xi32>
    %82 = vector.broadcast %81 : vector<8x1xi32> to vector<8x1008xi32>
    %83 = arith.cmpi eq, %82, %7 : vector<8x1008xi32>
    %84 = arith.extui %83 : vector<8x1008xi1> to vector<8x1008xi32>
    %85 = arith.sitofp %84 : vector<8x1008xi32> to vector<8x1008xf32>
    %86 = arith.addf %80, %85 : vector<8x1008xf32>
    %87 = vector.extract_strided_slice %3 {offsets = [0, 13], sizes = [8, 1], strides = [1, 1]} : vector<8x32xi32> to vector<8x1xi32>
    %88 = vector.broadcast %87 : vector<8x1xi32> to vector<8x1008xi32>
    %89 = arith.cmpi eq, %88, %7 : vector<8x1008xi32>
    %90 = arith.extui %89 : vector<8x1008xi1> to vector<8x1008xi32>
    %91 = arith.sitofp %90 : vector<8x1008xi32> to vector<8x1008xf32>
    %92 = arith.addf %86, %91 : vector<8x1008xf32>
    %93 = vector.extract_strided_slice %3 {offsets = [0, 14], sizes = [8, 1], strides = [1, 1]} : vector<8x32xi32> to vector<8x1xi32>
    %94 = vector.broadcast %93 : vector<8x1xi32> to vector<8x1008xi32>
    %95 = arith.cmpi eq, %94, %7 : vector<8x1008xi32>
    %96 = arith.extui %95 : vector<8x1008xi1> to vector<8x1008xi32>
    %97 = arith.sitofp %96 : vector<8x1008xi32> to vector<8x1008xf32>
    %98 = arith.addf %92, %97 : vector<8x1008xf32>
    %99 = vector.extract_strided_slice %3 {offsets = [0, 15], sizes = [8, 1], strides = [1, 1]} : vector<8x32xi32> to vector<8x1xi32>
    %100 = vector.broadcast %99 : vector<8x1xi32> to vector<8x1008xi32>
    %101 = arith.cmpi eq, %100, %7 : vector<8x1008xi32>
    %102 = arith.extui %101 : vector<8x1008xi1> to vector<8x1008xi32>
    %103 = arith.sitofp %102 : vector<8x1008xi32> to vector<8x1008xf32>
    %104 = arith.addf %98, %103 : vector<8x1008xf32>
    %105 = vector.extract_strided_slice %3 {offsets = [0, 16], sizes = [8, 1], strides = [1, 1]} : vector<8x32xi32> to vector<8x1xi32>
    %106 = vector.broadcast %105 : vector<8x1xi32> to vector<8x1008xi32>
    %107 = arith.cmpi eq, %106, %7 : vector<8x1008xi32>
    %108 = arith.extui %107 : vector<8x1008xi1> to vector<8x1008xi32>
    %109 = arith.sitofp %108 : vector<8x1008xi32> to vector<8x1008xf32>
    %110 = arith.addf %104, %109 : vector<8x1008xf32>
    %111 = vector.extract_strided_slice %3 {offsets = [0, 17], sizes = [8, 1], strides = [1, 1]} : vector<8x32xi32> to vector<8x1xi32>
    %112 = vector.broadcast %111 : vector<8x1xi32> to vector<8x1008xi32>
    %113 = arith.cmpi eq, %112, %7 : vector<8x1008xi32>
    %114 = arith.extui %113 : vector<8x1008xi1> to vector<8x1008xi32>
    %115 = arith.sitofp %114 : vector<8x1008xi32> to vector<8x1008xf32>
    %116 = arith.addf %110, %115 : vector<8x1008xf32>
    %117 = vector.extract_strided_slice %3 {offsets = [0, 18], sizes = [8, 1], strides = [1, 1]} : vector<8x32xi32> to vector<8x1xi32>
    %118 = vector.broadcast %117 : vector<8x1xi32> to vector<8x1008xi32>
    %119 = arith.cmpi eq, %118, %7 : vector<8x1008xi32>
    %120 = arith.extui %119 : vector<8x1008xi1> to vector<8x1008xi32>
    %121 = arith.sitofp %120 : vector<8x1008xi32> to vector<8x1008xf32>
    %122 = arith.addf %116, %121 : vector<8x1008xf32>
    %123 = vector.extract_strided_slice %3 {offsets = [0, 19], sizes = [8, 1], strides = [1, 1]} : vector<8x32xi32> to vector<8x1xi32>
    %124 = vector.broadcast %123 : vector<8x1xi32> to vector<8x1008xi32>
    %125 = arith.cmpi eq, %124, %7 : vector<8x1008xi32>
    %126 = arith.extui %125 : vector<8x1008xi1> to vector<8x1008xi32>
    %127 = arith.sitofp %126 : vector<8x1008xi32> to vector<8x1008xf32>
    %128 = arith.addf %122, %127 : vector<8x1008xf32>
    %129 = vector.extract_strided_slice %3 {offsets = [0, 20], sizes = [8, 1], strides = [1, 1]} : vector<8x32xi32> to vector<8x1xi32>
    %130 = vector.broadcast %129 : vector<8x1xi32> to vector<8x1008xi32>
    %131 = arith.cmpi eq, %130, %7 : vector<8x1008xi32>
    %132 = arith.extui %131 : vector<8x1008xi1> to vector<8x1008xi32>
    %133 = arith.sitofp %132 : vector<8x1008xi32> to vector<8x1008xf32>
    %134 = arith.addf %128, %133 : vector<8x1008xf32>
    %135 = vector.extract_strided_slice %3 {offsets = [0, 21], sizes = [8, 1], strides = [1, 1]} : vector<8x32xi32> to vector<8x1xi32>
    %136 = vector.broadcast %135 : vector<8x1xi32> to vector<8x1008xi32>
    %137 = arith.cmpi eq, %136, %7 : vector<8x1008xi32>
    %138 = arith.extui %137 : vector<8x1008xi1> to vector<8x1008xi32>
    %139 = arith.sitofp %138 : vector<8x1008xi32> to vector<8x1008xf32>
    %140 = arith.addf %134, %139 : vector<8x1008xf32>
    %141 = vector.extract_strided_slice %3 {offsets = [0, 22], sizes = [8, 1], strides = [1, 1]} : vector<8x32xi32> to vector<8x1xi32>
    %142 = vector.broadcast %141 : vector<8x1xi32> to vector<8x1008xi32>
    %143 = arith.cmpi eq, %142, %7 : vector<8x1008xi32>
    %144 = arith.extui %143 : vector<8x1008xi1> to vector<8x1008xi32>
    %145 = arith.sitofp %144 : vector<8x1008xi32> to vector<8x1008xf32>
    %146 = arith.addf %140, %145 : vector<8x1008xf32>
    %147 = vector.extract_strided_slice %3 {offsets = [0, 23], sizes = [8, 1], strides = [1, 1]} : vector<8x32xi32> to vector<8x1xi32>
    %148 = vector.broadcast %147 : vector<8x1xi32> to vector<8x1008xi32>
    %149 = arith.cmpi eq, %148, %7 : vector<8x1008xi32>
    %150 = arith.extui %149 : vector<8x1008xi1> to vector<8x1008xi32>
    %151 = arith.sitofp %150 : vector<8x1008xi32> to vector<8x1008xf32>
    %152 = arith.addf %146, %151 : vector<8x1008xf32>
    %153 = vector.extract_strided_slice %3 {offsets = [0, 24], sizes = [8, 1], strides = [1, 1]} : vector<8x32xi32> to vector<8x1xi32>
    %154 = vector.broadcast %153 : vector<8x1xi32> to vector<8x1008xi32>
    %155 = arith.cmpi eq, %154, %7 : vector<8x1008xi32>
    %156 = arith.extui %155 : vector<8x1008xi1> to vector<8x1008xi32>
    %157 = arith.sitofp %156 : vector<8x1008xi32> to vector<8x1008xf32>
    %158 = arith.addf %152, %157 : vector<8x1008xf32>
    %159 = vector.extract_strided_slice %3 {offsets = [0, 25], sizes = [8, 1], strides = [1, 1]} : vector<8x32xi32> to vector<8x1xi32>
    %160 = vector.broadcast %159 : vector<8x1xi32> to vector<8x1008xi32>
    %161 = arith.cmpi eq, %160, %7 : vector<8x1008xi32>
    %162 = arith.extui %161 : vector<8x1008xi1> to vector<8x1008xi32>
    %163 = arith.sitofp %162 : vector<8x1008xi32> to vector<8x1008xf32>
    %164 = arith.addf %158, %163 : vector<8x1008xf32>
    %165 = vector.extract_strided_slice %3 {offsets = [0, 26], sizes = [8, 1], strides = [1, 1]} : vector<8x32xi32> to vector<8x1xi32>
    %166 = vector.broadcast %165 : vector<8x1xi32> to vector<8x1008xi32>
    %167 = arith.cmpi eq, %166, %7 : vector<8x1008xi32>
    %168 = arith.extui %167 : vector<8x1008xi1> to vector<8x1008xi32>
    %169 = arith.sitofp %168 : vector<8x1008xi32> to vector<8x1008xf32>
    %170 = arith.addf %164, %169 : vector<8x1008xf32>
    %171 = vector.extract_strided_slice %3 {offsets = [0, 27], sizes = [8, 1], strides = [1, 1]} : vector<8x32xi32> to vector<8x1xi32>
    %172 = vector.broadcast %171 : vector<8x1xi32> to vector<8x1008xi32>
    %173 = arith.cmpi eq, %172, %7 : vector<8x1008xi32>
    %174 = arith.extui %173 : vector<8x1008xi1> to vector<8x1008xi32>
    %175 = arith.sitofp %174 : vector<8x1008xi32> to vector<8x1008xf32>
    %176 = arith.addf %170, %175 : vector<8x1008xf32>
    %177 = vector.extract_strided_slice %3 {offsets = [0, 28], sizes = [8, 1], strides = [1, 1]} : vector<8x32xi32> to vector<8x1xi32>
    %178 = vector.broadcast %177 : vector<8x1xi32> to vector<8x1008xi32>
    %179 = arith.cmpi eq, %178, %7 : vector<8x1008xi32>
    %180 = arith.extui %179 : vector<8x1008xi1> to vector<8x1008xi32>
    %181 = arith.sitofp %180 : vector<8x1008xi32> to vector<8x1008xf32>
    %182 = arith.addf %176, %181 : vector<8x1008xf32>
    %183 = vector.extract_strided_slice %3 {offsets = [0, 29], sizes = [8, 1], strides = [1, 1]} : vector<8x32xi32> to vector<8x1xi32>
    %184 = vector.broadcast %183 : vector<8x1xi32> to vector<8x1008xi32>
    %185 = arith.cmpi eq, %184, %7 : vector<8x1008xi32>
    %186 = arith.extui %185 : vector<8x1008xi1> to vector<8x1008xi32>
    %187 = arith.sitofp %186 : vector<8x1008xi32> to vector<8x1008xf32>
    %188 = arith.addf %182, %187 : vector<8x1008xf32>
    %189 = vector.extract_strided_slice %3 {offsets = [0, 30], sizes = [8, 1], strides = [1, 1]} : vector<8x32xi32> to vector<8x1xi32>
    %190 = vector.broadcast %189 : vector<8x1xi32> to vector<8x1008xi32>
    %191 = arith.cmpi eq, %190, %7 : vector<8x1008xi32>
    %192 = arith.extui %191 : vector<8x1008xi1> to vector<8x1008xi32>
    %193 = arith.sitofp %192 : vector<8x1008xi32> to vector<8x1008xf32>
    %194 = arith.addf %188, %193 : vector<8x1008xf32>
    %195 = vector.extract_strided_slice %3 {offsets = [0, 31], sizes = [8, 1], strides = [1, 1]} : vector<8x32xi32> to vector<8x1xi32>
    %196 = vector.broadcast %195 : vector<8x1xi32> to vector<8x1008xi32>
    %197 = arith.cmpi eq, %196, %7 : vector<8x1008xi32>
    %198 = arith.extui %197 : vector<8x1008xi1> to vector<8x1008xi32>
    %199 = arith.sitofp %198 : vector<8x1008xi32> to vector<8x1008xf32>
    %200 = arith.addf %194, %199 : vector<8x1008xf32>
    %201 = arith.truncf %200 : vector<8x1008xf32> to vector<8x1008xbf16>
    %c0_2 = arith.constant 0 : index
    %c0_3 = arith.constant 0 : index
    %202 = vector.load %arg12[%c0_2, %c0_3] : memref<8x128xf32, #tpu.memory_space<vmem>>, vector<8x128xf32>
    %c0_4 = arith.constant 0 : index
    %c0_5 = arith.constant 0 : index
    %203 = vector.load %arg2[%c0_4, %c0_5] : memref<1008x128xbf16, #tpu.memory_space<vmem>>, vector<1008x128xbf16>
    %cst_6 = arith.constant dense<0.000000e+00> : vector<8x128xf32>
    %204 = tpu.matmul %201, %203, %cst_6 {dimension_numbers = #tpu.dot_dimension_numbers<[1], [0], [0], [1], [0, 0, 1, 1], [], []>} : vector<8x1008xbf16>, vector<1008x128xbf16>, vector<8x128xf32> -> vector<8x128xf32>
    %205 = arith.addf %202, %204 : vector<8x128xf32>
    %c0_7 = arith.constant 0 : index
    %c0_8 = arith.constant 0 : index
    %206 = vector.load %arg12[%c0_7, %c0_8] : memref<8x128xf32, #tpu.memory_space<vmem>>, vector<8x128xf32>
    tpu.vector_store %arg12[%c0_7, %c0_8], %205 {strides = array<i32>} : memref<8x128xf32, #tpu.memory_space<vmem>>, vector<8x128xf32>,
    %c0_i32_9 = arith.constant 0 : i32
    %207 = arith.cmpi eq, %arg0, %c0_i32_9 : i32
    %208 = arith.extui %207 : i1 to i32
    %c0_i32_10 = arith.constant 0 : i32
    %209 = arith.cmpi ne, %208, %c0_i32_10 : i32
    scf.if %209 {
      %c0_11 = arith.constant 0 : index
      %c0_12 = arith.constant 0 : index
      %210 = vector.load %arg12[%c0_11, %c0_12] : memref<8x128xf32, #tpu.memory_space<vmem>>, vector<8x128xf32>
      %cst_13 = arith.constant 3.125000e-02 : f32
      %211 = vector.broadcast %cst_13 : f32 to vector<8x128xf32>
      %212 = arith.mulf %210, %211 : vector<8x128xf32>
      %c0_14 = arith.constant 0 : index
      %c0_15 = arith.constant 0 : index
      %213 = vector.load %arg3[%c0_14, %c0_15] : memref<128x128xbf16, #tpu.memory_space<vmem>>, vector<128x128xbf16>
      %c0_16 = arith.constant 0 : index
      %c0_17 = arith.constant 0 : index
      %214 = vector.load %arg4[%c0_16, %c0_17] : memref<1x128xf32, #tpu.memory_space<vmem>>, vector<1x128xf32>
      %c0_18 = arith.constant 0 : index
      %c0_19 = arith.constant 0 : index
      %215 = vector.load %arg5[%c0_18, %c0_19] : memref<1x128xf32, #tpu.memory_space<vmem>>, vector<1x128xf32>
      %c0_20 = arith.constant 0 : index
      %c0_21 = arith.constant 0 : index
      %216 = vector.load %arg6[%c0_20, %c0_21] : memref<1x128xf32, #tpu.memory_space<vmem>>, vector<1x128xf32>
      %c0_22 = arith.constant 0 : index
      %c0_23 = arith.constant 0 : index
      %217 = vector.load %arg7[%c0_22, %c0_23] : memref<128x1xbf16, #tpu.memory_space<vmem>>, vector<128x1xbf16>
      %c0_24 = arith.constant 0 : index
      %c0_25 = arith.constant 0 : index
      %218 = vector.load %arg8[%c0_24, %c0_25] : memref<1x1xf32, #tpu.memory_space<vmem>>, vector<1x1xf32>
      %c0_26 = arith.constant 0 : index
      %c0_27 = arith.constant 0 : index
      %219 = vector.load %arg9[%c0_26, %c0_27] : memref<8x1xf32, #tpu.memory_space<vmem>>, vector<8x1xf32>
      %220 = arith.extf %213 : vector<128x128xbf16> to vector<128x128xf32>
      %cst_28 = arith.constant dense<0.000000e+00> : vector<8x128xf32>
      %221 = tpu.matmul %212, %220, %cst_28 {dimension_numbers = #tpu.dot_dimension_numbers<[1], [0], [0], [1], [0, 0, 1, 1], [], []>} : vector<8x128xf32>, vector<128x128xf32>, vector<8x128xf32> -> vector<8x128xf32>
      %222 = vector.broadcast %214 : vector<1x128xf32> to vector<8x128xf32>
      %223 = arith.addf %221, %222 : vector<8x128xf32>
      %cst_29 = arith.constant dense<0.000000e+00> : vector<128xf32>
      %224 = vector.multi_reduction <add>, %223, %cst_29 [0] : vector<8x128xf32> to vector<128xf32>
      %225 = vector.shape_cast %224 : vector<128xf32> to vector<1x128xf32>
      %cst_30 = arith.constant 8.000000e+00 : f32
      %226 = vector.broadcast %cst_30 : f32 to vector<1x128xf32>
      %227 = arith.divf %225, %226 : vector<1x128xf32>
      %228 = vector.broadcast %227 : vector<1x128xf32> to vector<8x128xf32>
      %229 = arith.subf %223, %228 : vector<8x128xf32>
      %230 = arith.mulf %229, %229 : vector<8x128xf32>
      %cst_31 = arith.constant dense<0.000000e+00> : vector<128xf32>
      %231 = vector.multi_reduction <add>, %230, %cst_31 [0] : vector<8x128xf32> to vector<128xf32>
      %232 = vector.shape_cast %231 : vector<128xf32> to vector<1x128xf32>
      %cst_32 = arith.constant 8.000000e+00 : f32
      %233 = vector.broadcast %cst_32 : f32 to vector<1x128xf32>
      %234 = arith.divf %232, %233 : vector<1x128xf32>
      %235 = vector.broadcast %227 : vector<1x128xf32> to vector<8x128xf32>
      %236 = arith.subf %223, %235 : vector<8x128xf32>
      %cst_33 = arith.constant 9.99999974E-6 : f32
      %237 = vector.broadcast %cst_33 : f32 to vector<1x128xf32>
      %238 = arith.addf %234, %237 : vector<1x128xf32>
      %239 = math.rsqrt %238 : vector<1x128xf32>
      %240 = vector.broadcast %239 : vector<1x128xf32> to vector<8x128xf32>
      %241 = arith.mulf %236, %240 : vector<8x128xf32>
      %242 = vector.broadcast %215 : vector<1x128xf32> to vector<8x128xf32>
      %243 = arith.mulf %241, %242 : vector<8x128xf32>
      %244 = vector.broadcast %216 : vector<1x128xf32> to vector<8x128xf32>
      %245 = arith.addf %243, %244 : vector<8x128xf32>
      %cst_34 = arith.constant 0.000000e+00 : f32
      %246 = vector.broadcast %cst_34 : f32 to vector<8x128xf32>
      %247 = arith.maximumf %245, %246 : vector<8x128xf32>
      %248 = arith.extf %217 : vector<128x1xbf16> to vector<128x1xf32>
      %cst_35 = arith.constant dense<0.000000e+00> : vector<8x1xf32>
      %249 = tpu.matmul %247, %248, %cst_35 {dimension_numbers = #tpu.dot_dimension_numbers<[1], [0], [0], [1], [0, 0, 1, 1], [], []>} : vector<8x128xf32>, vector<128x1xf32>, vector<8x1xf32> -> vector<8x1xf32>
      %250 = vector.broadcast %218 : vector<1x1xf32> to vector<8x1xf32>
      %251 = arith.addf %249, %250 : vector<8x1xf32>
      %cst_36 = arith.constant 0.000000e+00 : f32
      %252 = vector.broadcast %cst_36 : f32 to vector<8x1xf32>
      %253 = arith.maximumf %251, %252 : vector<8x1xf32>
      %254 = arith.mulf %251, %219 : vector<8x1xf32>
      %255 = arith.subf %253, %254 : vector<8x1xf32>
      %256 = math.absf %251 : vector<8x1xf32>
      %cst_37 = arith.constant 0.000000e+00 : f32
      %257 = vector.broadcast %cst_37 : f32 to vector<8x1xf32>
      %258 = arith.subf %257, %256 : vector<8x1xf32>
      %259 = math.exp %258 : vector<8x1xf32>
      %260 = math.log1p %259 : vector<8x1xf32>
      %261 = arith.addf %255, %260 : vector<8x1xf32>
      %262 = vector.shape_cast %261 : vector<8x1xf32> to vector<1x8x1xf32>
      %cst_38 = arith.constant dense<0.000000e+00> : vector<1xf32>
      %263 = vector.multi_reduction <add>, %262, %cst_38 [1, 2] : vector<1x8x1xf32> to vector<1xf32>
      %264 = vector.shape_cast %263 : vector<1xf32> to vector<1x1x1xf32>
      %265 = vector.extract %264[0, 0, 0] : f32 from vector<1x1x1xf32>
      %cst_39 = arith.constant 8.000000e+00 : f32
      %266 = arith.divf %265, %cst_39 : f32
      %267 = vector.broadcast %266 : f32 to vector<1x1xf32>
      %c0_40 = arith.constant 0 : index
      %c0_41 = arith.constant 0 : index
      %268 = vector.load %arg10[%c0_40, %c0_41] : memref<8x1xf32, #tpu.memory_space<vmem>>, vector<8x1xf32>
      tpu.vector_store %arg10[%c0_40, %c0_41], %251 {strides = array<i32>} : memref<8x1xf32, #tpu.memory_space<vmem>>, vector<8x1xf32>,
      %c0_42 = arith.constant 0 : index
      %c0_43 = arith.constant 0 : index
      %269 = vector.load %arg11[%c0_42, %c0_43] : memref<1x1xf32, #tpu.memory_space<vmem>>, vector<1x1xf32>
      tpu.vector_store %arg11[%c0_42, %c0_43], %267 {strides = array<i32>} : memref<1x1xf32, #tpu.memory_space<vmem>>, vector<1x1xf32>,
    } else {
    }
    return
  }
  func.func @transform_0(%arg0: i32) -> (i32, i32) {
    %c0_i32 = arith.constant 0 : i32
    %c0_i32_0 = arith.constant 0 : i32
    %c0_i32_1 = arith.constant 0 : i32
    return %c0_i32, %c0_i32_0 : i32, i32
  }
  func.func @transform_1(%arg0: i32) -> (i32, i32) {
    %c0_i32 = arith.constant 0 : i32
    %c0_i32_0 = arith.constant 0 : i32
    return %arg0, %c0_i32 : i32, i32
  }
  func.func @transform_2(%arg0: i32) -> (i32, i32) {
    %c0_i32 = arith.constant 0 : i32
    %c0_i32_0 = arith.constant 0 : i32
    %c0_i32_1 = arith.constant 0 : i32
    return %c0_i32, %c0_i32_0 : i32, i32
  }
  func.func @transform_3(%arg0: i32) -> (i32, i32) {
    %c0_i32 = arith.constant 0 : i32
    %c0_i32_0 = arith.constant 0 : i32
    %c0_i32_1 = arith.constant 0 : i32
    return %c0_i32, %c0_i32_0 : i32, i32
  }
  func.func @transform_4(%arg0: i32) -> (i32, i32) {
    %c0_i32 = arith.constant 0 : i32
    %c0_i32_0 = arith.constant 0 : i32
    %c0_i32_1 = arith.constant 0 : i32
    return %c0_i32, %c0_i32_0 : i32, i32
  }
  func.func @transform_5(%arg0: i32) -> (i32, i32) {
    %c0_i32 = arith.constant 0 : i32
    %c0_i32_0 = arith.constant 0 : i32
    %c0_i32_1 = arith.constant 0 : i32
    return %c0_i32, %c0_i32_0 : i32, i32
  }
  func.func @transform_6(%arg0: i32) -> (i32, i32) {
    %c0_i32 = arith.constant 0 : i32
    %c0_i32_0 = arith.constant 0 : i32
    %c0_i32_1 = arith.constant 0 : i32
    return %c0_i32, %c0_i32_0 : i32, i32
  }
  func.func @transform_7(%arg0: i32) -> (i32, i32) {
    %c0_i32 = arith.constant 0 : i32
    %c0_i32_0 = arith.constant 0 : i32
    %c0_i32_1 = arith.constant 0 : i32
    return %c0_i32, %c0_i32_0 : i32, i32
  }
  func.func @transform_8(%arg0: i32) -> (i32, i32) {
    %c0_i32 = arith.constant 0 : i32
    %c0_i32_0 = arith.constant 0 : i32
    %c0_i32_1 = arith.constant 0 : i32
    return %c0_i32, %c0_i32_0 : i32, i32
  }
  func.func @transform_9(%arg0: i32) -> (i32, i32) {
    %c0_i32 = arith.constant 0 : i32
    %c0_i32_0 = arith.constant 0 : i32
    %c0_i32_1 = arith.constant 0 : i32
    return %c0_i32, %c0_i32_0 : i32, i32
  }
  func.func @transform_10(%arg0: i32) -> (i32, i32) {
    %c0_i32 = arith.constant 0 : i32
    %c0_i32_0 = arith.constant 0 : i32
    %c0_i32_1 = arith.constant 0 : i32
    return %c0_i32, %c0_i32_0 : i32, i32
  }
}

</mosaic_0001>

<llo_original>
// kernel: tpu_custom_call.1
$region0: #{tpu_custom_call.1}
  #allocation0 [shape = 'u32[]', space=smem, size = 0x4, offset = 0x4, fixed_abs, tag = 'smem constant byte address 0x4 - core index']
  #allocation1 [shape = 'u32[144,128]{1,0:T(1,128)}', space=vmem, size = 0x12000, scoped, tag = 'internal scratch']
  #allocation2 [shape = 'f32[8,128]{1,0:T(8,128)}', space=vmem, size = 0x1000, scoped, tag = 'scratch operand']
  #allocation3 [shape = 'f32[1,1]{1,0:T(1,128)S(1)}', space=vmem, size = 0x200, scoped, tag = 'scoped memory for tpu_custom_call.1']
  %s0 = inlined_call_operand.vmem [shape: s32[8,32], index: 0, kind: input, shape index: {}]
  %s1 = inlined_call_operand.hbm [shape: bf16[1008,128], index: 1, kind: input, shape index: {}]
  %s2 = inlined_call_operand.vmem [shape: bf16[128,128], index: 2, kind: input, shape index: {}]
  %s3 = inlined_call_operand.vmem [shape: f32[1,128], index: 3, kind: input, shape index: {}]
  %s4 = inlined_call_operand.vmem [shape: f32[1,128], index: 4, kind: input, shape index: {}]
  %s5 = inlined_call_operand.vmem [shape: f32[1,128], index: 5, kind: input, shape index: {}]
  %s6 = inlined_call_operand.vmem [shape: bf16[128,1], index: 6, kind: input, shape index: {}]
  %s7 = inlined_call_operand.<no memory space> [shape: f32[1,1], index: 7, kind: input, shape index: {}]
  %s8 = inlined_call_operand.vmem [shape: f32[8,1], index: 8, kind: input, shape index: {}]
  %s9 = inlined_call_operand.vmem [shape: f32[8,1], index: 9, kind: output, shape index: {0}]
  %s10 = inlined_call_operand.hbm [shape: f32[1,1], index: 10, kind: output, shape index: {1}]
  %11 = xla_tuple %s9, %s10
  %s12 = sld [smem:[#allocation0]]
  $region66: #{tpu_custom_call.1} parent=0
    _
  %s14 = ssub.s32 1, %s12
  %s15 = scalar_select 0, %s14, %s12
  %v16 = vstv %s7
  %17 = vst [vmem:[#allocation3] sm:$0x1] %v16
  $region1: #{tpu_custom_call.1} parent=0
    #allocation4 [shape = 'u8[258048]{0}', space=vmem, size = 0x3f000, scoped, tag = 'input window, operand 1, single buffered']
    #allocation5 [shape = 's32[1]{0}', space=sflag, size = 0x4, scoped, tag = 'scoped memory for tpu_custom_call.1']
    #allocation6 [shape = 's32[1]{0}', space=sflag, size = 0x4, scoped, tag = 'scoped memory for tpu_custom_call.1']
    #allocation7 [shape = 'u8[512]{0}', space=vmem, size = 0x400, scoped, tag = 'output window, operand 1, single buffered']
    %18 = vsyncpa [#allocation5], 0
    %19 = vsyncpa [#allocation6], 0
    // Predicated region
    $region2: #{tpu_custom_call.1} parent=1 // pred_check
      _
    $region3: #{tpu_custom_call.1} parent=1 // pred_check_branch
      %21 = sbr.rel (0) target = $region5
    $region4: #{tpu_custom_call.1} parent=1 // pred_region
      _
    $region5: #{tpu_custom_call.1} parent=1 // pred_fallthru
      _
    // Predicated region
    $region6: #{tpu_custom_call.1} parent=1 // pred_check
      _
    $region7: #{tpu_custom_call.1} parent=1 // pred_check_branch
      %23 = sbr.rel (0) target = $region9
    $region8: #{tpu_custom_call.1} parent=1 // pred_region
      %s25 = ssub.s32 8064, 8064
      %26 = vsyncadd [#allocation5], %s25
      %s27 = sshll.u32 [#allocation4], 4
      %s28 = int_to_ptr.vmem [resolvable:$true] %s27
      %33 = dma.hbm_to_vmem [thread:$0]  %s1, 8064, %s28, [#allocation5], 64, 64, 4
    $region9: #{tpu_custom_call.1} parent=1 // pred_fallthru
      _
    // Predicated region
    $region10: #{tpu_custom_call.1} parent=1 // pred_check
      _
    $region11: #{tpu_custom_call.1} parent=1 // pred_check_branch
      %35 = sbr.rel (0) target = $region13
    $region12: #{tpu_custom_call.1} parent=1 // pred_region
      _
    $region13: #{tpu_custom_call.1} parent=1 // pred_fallthru
      _
    // Predicated region
    $region14: #{tpu_custom_call.1} parent=1 // pred_check
      _
    $region15: #{tpu_custom_call.1} parent=1 // pred_check_branch
      %37 = sbr.rel (0) target = $region17
    $region16: #{tpu_custom_call.1} parent=1 // pred_region
      _
    $region17: #{tpu_custom_call.1} parent=1 // pred_fallthru
      _
    // Predicated region
    $region18: #{tpu_custom_call.1} parent=1 // pred_check
      _
    $region19: #{tpu_custom_call.1} parent=1 // pred_check_branch
      %39 = sbr.rel (0) target = $region21
    $region20: #{tpu_custom_call.1} parent=1 // pred_region
      _
    $region21: #{tpu_custom_call.1} parent=1 // pred_fallthru
      _
    // Predicated region
    $region22: #{tpu_custom_call.1} parent=1 // pred_check
      _
    $region23: #{tpu_custom_call.1} parent=1 // pred_check_branch
      %41 = sbr.rel (0) target = $region25
    $region24: #{tpu_custom_call.1} parent=1 // pred_region
      _
    $region25: #{tpu_custom_call.1} parent=1 // pred_fallthru
      _
    // Predicated region
    $region26: #{tpu_custom_call.1} parent=1 // pred_check
      _
    $region27: #{tpu_custom_call.1} parent=1 // pred_check_branch
      %43 = sbr.rel (0) target = $region29
    $region28: #{tpu_custom_call.1} parent=1 // pred_region
      _
    $region29: #{tpu_custom_call.1} parent=1 // pred_fallthru
      _
    // Predicated region
    $region30: #{tpu_custom_call.1} parent=1 // pred_check
      _
    $region31: #{tpu_custom_call.1} parent=1 // pred_check_branch
      %45 = sbr.rel (0) target = $region33
    $region32: #{tpu_custom_call.1} parent=1 // pred_region
      _
    $region33: #{tpu_custom_call.1} parent=1 // pred_fallthru
      _
    // Predicated region
    $region34: #{tpu_custom_call.1} parent=1 // pred_check
      _
    $region35: #{tpu_custom_call.1} parent=1 // pred_check_branch
      %47 = sbr.rel (0) target = $region37
    $region36: #{tpu_custom_call.1} parent=1 // pred_region
      _
    $region37: #{tpu_custom_call.1} parent=1 // pred_fallthru
      _
    // Predicated region
    $region38: #{tpu_custom_call.1} parent=1 // pred_check
      _
    $region39: #{tpu_custom_call.1} parent=1 // pred_check_branch
      %49 = sbr.rel (0) target = $region41
    $region40: #{tpu_custom_call.1} parent=1 // pred_region
      %50 = dma.done [#allocation5], 8064
    $region41: #{tpu_custom_call.1} parent=1 // pred_fallthru
      _
    %p52 = scmp.eq.s32.totalorder 0, 0
    // Predicated region
    $region42: #{tpu_custom_call.1} parent=1 // pred_check
      %p53 = pneg %p52
    $region43: #{tpu_custom_call.1} parent=1 // pred_check_branch
      %55 = sbr.rel (%p53) target = $region45
    $region44: #{tpu_custom_call.1} parent=1 // pred_region
      %56 = vst [vmem:[#allocation2] sm:$0xff] 0.0
    $region45: #{tpu_custom_call.1} parent=1 // pred_fallthru
      _
    %v57 = vld [vmem:[%s0] sm:$0xff]
    %s58 = smul.u32 0, 1008
    %v59 = vlaneseq
    %v60 = vand.u32 %v59, 127
    %v61 = vadd.s32 %v60, 128
    %v62 = vadd.s32 %v60, 256
    %v63 = vadd.s32 %v60, 384
    %v64 = vadd.s32 %v60, 512
    %v65 = vadd.s32 %v60, 640
    %v66 = vadd.s32 %v60, 768
    %v67 = vadd.s32 %v60, 896
    %v68 = vstv %s58
    %v69 = vadd.s32 %v68, %v60
    %v70 = vadd.s32 %v68, %v61
    %v71 = vadd.s32 %v68, %v62
    %v72 = vadd.s32 %v68, %v63
    %v73 = vadd.s32 %v68, %v64
    %v74 = vadd.s32 %v68, %v65
    %v75 = vadd.s32 %v68, %v66
    %v76 = vadd.s32 %v68, %v67
    %77 = vset.pattern.permute.xlu0 0
    %78 = vperm.xlu0 %77, %v57
    %v79 = vpop.permute.xlu0 %78
    %vm80 = vcmp.eq.s32.totalorder %v79, %v69
    %vm81 = vcmp.eq.s32.totalorder %v79, %v70
    %vm82 = vcmp.eq.s32.totalorder %v79, %v71
    %vm83 = vcmp.eq.s32.totalorder %v79, %v72
    %vm84 = vcmp.eq.s32.totalorder %v79, %v73
    %vm85 = vcmp.eq.s32.totalorder %v79, %v74
    %vm86 = vcmp.eq.s32.totalorder %v79, %v75
    %vm87 = vcmp.eq.s32.totalorder %v79, %v76
    %v88 = vsel %vm80, 1, 0
    %v89 = vsel %vm81, 1, 0
    %v90 = vsel %vm82, 1, 0
    %v91 = vsel %vm83, 1, 0
    %v92 = vsel %vm84, 1, 0
    %v93 = vsel %vm85, 1, 0
    %v94 = vsel %vm86, 1, 0
    %v95 = vsel %vm87, 1, 0
    %v96 = vcvt.s32.f32 %v88
    %v97 = vcvt.s32.f32 %v89
    %v98 = vcvt.s32.f32 %v90
    %v99 = vcvt.s32.f32 %v91
    %v100 = vcvt.s32.f32 %v92
    %v101 = vcvt.s32.f32 %v93
    %v102 = vcvt.s32.f32 %v94
    %v103 = vcvt.s32.f32 %v95
    %v104 = vadd.f32 %v96, 0.0
    %v105 = vadd.f32 %v97, 0.0
    %v106 = vadd.f32 %v98, 0.0
    %v107 = vadd.f32 %v99, 0.0
    %v108 = vadd.f32 %v100, 0.0
    %v109 = vadd.f32 %v101, 0.0
    %v110 = vadd.f32 %v102, 0.0
    %v111 = vadd.f32 %v103, 0.0
    %112 = vset.pattern.permute.xlu0 1
    %113 = vperm.xlu0 %112, %v57
    %v114 = vpop.permute.xlu0 %113
    %vm115 = vcmp.eq.s32.totalorder %v114, %v69
    %vm116 = vcmp.eq.s32.totalorder %v114, %v70
    %vm117 = vcmp.eq.s32.totalorder %v114, %v71
    %vm118 = vcmp.eq.s32.totalorder %v114, %v72
    %vm119 = vcmp.eq.s32.totalorder %v114, %v73
    %vm120 = vcmp.eq.s32.totalorder %v114, %v74
    %vm121 = vcmp.eq.s32.totalorder %v114, %v75
    %vm122 = vcmp.eq.s32.totalorder %v114, %v76
    %v123 = vsel %vm115, 1, 0
    %v124 = vsel %vm116, 1, 0
    %v125 = vsel %vm117, 1, 0
    %v126 = vsel %vm118, 1, 0
    %v127 = vsel %vm119, 1, 0
    %v128 = vsel %vm120, 1, 0
    %v129 = vsel %vm121, 1, 0
    %v130 = vsel %vm122, 1, 0
    %v131 = vcvt.s32.f32 %v123
    %v132 = vcvt.s32.f32 %v124
    %v133 = vcvt.s32.f32 %v125
    %v134 = vcvt.s32.f32 %v126
    %v135 = vcvt.s32.f32 %v127
    %v136 = vcvt.s32.f32 %v128
    %v137 = vcvt.s32.f32 %v129
    %v138 = vcvt.s32.f32 %v130
    %v139 = vadd.f32 %v104, %v131
    %v140 = vadd.f32 %v105, %v132
    %v141 = vadd.f32 %v106, %v133
    %v142 = vadd.f32 %v107, %v134
    %v143 = vadd.f32 %v108, %v135
    %v144 = vadd.f32 %v109, %v136
    %v145 = vadd.f32 %v110, %v137
    %v146 = vadd.f32 %v111, %v138
    %147 = vset.pattern.permute.xlu0 2
    %148 = vperm.xlu0 %147, %v57
    %v149 = vpop.permute.xlu0 %148
    %vm150 = vcmp.eq.s32.totalorder %v149, %v69
    %vm151 = vcmp.eq.s32.totalorder %v149, %v70
    %vm152 = vcmp.eq.s32.totalorder %v149, %v71
    %vm153 = vcmp.eq.s32.totalorder %v149, %v72
    %vm154 = vcmp.eq.s32.totalorder %v149, %v73
    %vm155 = vcmp.eq.s32.totalorder %v149, %v74
    %vm156 = vcmp.eq.s32.totalorder %v149, %v75
    %vm157 = vcmp.eq.s32.totalorder %v149, %v76
    %v158 = vsel %vm150, 1, 0
    %v159 = vsel %vm151, 1, 0
    %v160 = vsel %vm152, 1, 0
    %v161 = vsel %vm153, 1, 0
    %v162 = vsel %vm154, 1, 0
    %v163 = vsel %vm155, 1, 0
    %v164 = vsel %vm156, 1, 0
    %v165 = vsel %vm157, 1, 0
    %v166 = vcvt.s32.f32 %v158
    %v167 = vcvt.s32.f32 %v159
    %v168 = vcvt.s32.f32 %v160
    %v169 = vcvt.s32.f32 %v161
    %v170 = vcvt.s32.f32 %v162
    %v171 = vcvt.s32.f32 %v163
    %v172 = vcvt.s32.f32 %v164
    %v173 = vcvt.s32.f32 %v165
    %v174 = vadd.f32 %v139, %v166
    %v175 = vadd.f32 %v140, %v167
    %v176 = vadd.f32 %v141, %v168
    %v177 = vadd.f32 %v142, %v169
    %v178 = vadd.f32 %v143, %v170
    %v179 = vadd.f32 %v144, %v171
    %v180 = vadd.f32 %v145, %v172
    %v181 = vadd.f32 %v146, %v173
    %182 = vset.pattern.permute.xlu0 3
    %183 = vperm.xlu0 %182, %v57
    %v184 = vpop.permute.xlu0 %183
    %vm185 = vcmp.eq.s32.totalorder %v184, %v69
    %vm186 = vcmp.eq.s32.totalorder %v184, %v70
    %vm187 = vcmp.eq.s32.totalorder %v184, %v71
    %vm188 = vcmp.eq.s32.totalorder %v184, %v72
    %vm189 = vcmp.eq.s32.totalorder %v184, %v73
    %vm190 = vcmp.eq.s32.totalorder %v184, %v74
    %vm191 = vcmp.eq.s32.totalorder %v184, %v75
    %vm192 = vcmp.eq.s32.totalorder %v184, %v76
    %v193 = vsel %vm185, 1, 0
    %v194 = vsel %vm186, 1, 0
    %v195 = vsel %vm187, 1, 0
    %v196 = vsel %vm188, 1, 0
    %v197 = vsel %vm189, 1, 0
    %v198 = vsel %vm190, 1, 0
    %v199 = vsel %vm191, 1, 0
    %v200 = vsel %vm192, 1, 0
    %v201 = vcvt.s32.f32 %v193
    %v202 = vcvt.s32.f32 %v194
    %v203 = vcvt.s32.f32 %v195
    %v204 = vcvt.s32.f32 %v196
    %v205 = vcvt.s32.f32 %v197
    %v206 = vcvt.s32.f32 %v198
    %v207 = vcvt.s32.f32 %v199
    %v208 = vcvt.s32.f32 %v200
    %v209 = vadd.f32 %v174, %v201
    %v210 = vadd.f32 %v175, %v202
    %v211 = vadd.f32 %v176, %v203
    %v212 = vadd.f32 %v177, %v204
    %v213 = vadd.f32 %v178, %v205
    %v214 = vadd.f32 %v179, %v206
    %v215 = vadd.f32 %v180, %v207
    %v216 = vadd.f32 %v181, %v208
    %217 = vset.pattern.permute.xlu0 4
    %218 = vperm.xlu0 %217, %v57
    %v219 = vpop.permute.xlu0 %218
    %vm220 = vcmp.eq.s32.totalorder %v219, %v69
    %vm221 = vcmp.eq.s32.totalorder %v219, %v70
    %vm222 = vcmp.eq.s32.totalorder %v219, %v71
    %vm223 = vcmp.eq.s32.totalorder %v219, %v72
    %vm224 = vcmp.eq.s32.totalorder %v219, %v73
    %vm225 = vcmp.eq.s32.totalorder %v219, %v74
    %vm226 = vcmp.eq.s32.totalorder %v219, %v75
    %vm227 = vcmp.eq.s32.totalorder %v219, %v76
    %v228 = vsel %vm220, 1, 0
    %v229 = vsel %vm221, 1, 0
    %v230 = vsel %vm222, 1, 0
    %v231 = vsel %vm223, 1, 0
    %v232 = vsel %vm224, 1, 0
    %v233 = vsel %vm225, 1, 0
    %v234 = vsel %vm226, 1, 0
    %v235 = vsel %vm227, 1, 0
    %v236 = vcvt.s32.f32 %v228
    %v237 = vcvt.s32.f32 %v229
    %v238 = vcvt.s32.f32 %v230
    %v239 = vcvt.s32.f32 %v231
    %v240 = vcvt.s32.f32 %v232
    %v241 = vcvt.s32.f32 %v233
    %v242 = vcvt.s32.f32 %v234
    %v243 = vcvt.s32.f32 %v235
    %v244 = vadd.f32 %v209, %v236
    %v245 = vadd.f32 %v210, %v237
    %v246 = vadd.f32 %v211, %v238
    %v247 = vadd.f32 %v212, %v239
    %v248 = vadd.f32 %v213, %v240
    %v249 = vadd.f32 %v214, %v241
    %v250 = vadd.f32 %v215, %v242
    %v251 = vadd.f32 %v216, %v243
    %252 = vset.pattern.permute.xlu0 5
    %253 = vperm.xlu0 %252, %v57
    %v254 = vpop.permute.xlu0 %253
    %vm255 = vcmp.eq.s32.totalorder %v254, %v69
    %vm256 = vcmp.eq.s32.totalorder %v254, %v70
    %vm257 = vcmp.eq.s32.totalorder %v254, %v71
    %vm258 = vcmp.eq.s32.totalorder %v254, %v72
    %vm259 = vcmp.eq.s32.totalorder %v254, %v73
    %vm260 = vcmp.eq.s32.totalorder %v254, %v74
    %vm261 = vcmp.eq.s32.totalorder %v254, %v75
    %vm262 = vcmp.eq.s32.totalorder %v254, %v76
    %v263 = vsel %vm255, 1, 0
    %v264 = vsel %vm256, 1, 0
    %v265 = vsel %vm257, 1, 0
    %v266 = vsel %vm258, 1, 0
    %v267 = vsel %vm259, 1, 0
    %v268 = vsel %vm260, 1, 0
    %v269 = vsel %vm261, 1, 0
    %v270 = vsel %vm262, 1, 0
    %v271 = vcvt.s32.f32 %v263
    %v272 = vcvt.s32.f32 %v264
    %v273 = vcvt.s32.f32 %v265
    %v274 = vcvt.s32.f32 %v266
    %v275 = vcvt.s32.f32 %v267
    %v276 = vcvt.s32.f32 %v268
    %v277 = vcvt.s32.f32 %v269
    %v278 = vcvt.s32.f32 %v270
    %v279 = vadd.f32 %v244, %v271
    %v280 = vadd.f32 %v245, %v272
    %v281 = vadd.f32 %v246, %v273
    %v282 = vadd.f32 %v247, %v274
    %v283 = vadd.f32 %v248, %v275
    %v284 = vadd.f32 %v249, %v276
    %v285 = vadd.f32 %v250, %v277
    %v286 = vadd.f32 %v251, %v278
    %287 = vset.pattern.permute.xlu0 6
    %288 = vperm.xlu0 %287, %v57
    %v289 = vpop.permute.xlu0 %288
    %vm290 = vcmp.eq.s32.totalorder %v289, %v69
    %vm291 = vcmp.eq.s32.totalorder %v289, %v70
    %vm292 = vcmp.eq.s32.totalorder %v289, %v71
    %vm293 = vcmp.eq.s32.totalorder %v289, %v72
    %vm294 = vcmp.eq.s32.totalorder %v289, %v73
    %vm295 = vcmp.eq.s32.totalorder %v289, %v74
    %vm296 = vcmp.eq.s32.totalorder %v289, %v75
    %vm297 = vcmp.eq.s32.totalorder %v289, %v76
    %v298 = vsel %vm290, 1, 0
    %v299 = vsel %vm291, 1, 0
    %v300 = vsel %vm292, 1, 0
    %v301 = vsel %vm293, 1, 0
    %v302 = vsel %vm294, 1, 0
    %v303 = vsel %vm295, 1, 0
    %v304 = vsel %vm296, 1, 0
    %v305 = vsel %vm297, 1, 0
    %v306 = vcvt.s32.f32 %v298
    %v307 = vcvt.s32.f32 %v299
    %v308 = vcvt.s32.f32 %v300
    %v309 = vcvt.s32.f32 %v301
    %v310 = vcvt.s32.f32 %v302
    %v311 = vcvt.s32.f32 %v303
    %v312 = vcvt.s32.f32 %v304
    %v313 = vcvt.s32.f32 %v305
    %v314 = vadd.f32 %v279, %v306
    %v315 = vadd.f32 %v280, %v307
    %v316 = vadd.f32 %v281, %v308
    %v317 = vadd.f32 %v282, %v309
    %v318 = vadd.f32 %v283, %v310
    %v319 = vadd.f32 %v284, %v311
    %v320 = vadd.f32 %v285, %v312
    %v321 = vadd.f32 %v286, %v313
    %322 = vset.pattern.permute.xlu0 7
    %323 = vperm.xlu0 %322, %v57
    %v324 = vpop.permute.xlu0 %323
    %vm325 = vcmp.eq.s32.totalorder %v324, %v69
    %vm326 = vcmp.eq.s32.totalorder %v324, %v70
    %vm327 = vcmp.eq.s32.totalorder %v324, %v71
    %vm328 = vcmp.eq.s32.totalorder %v324, %v72
    %vm329 = vcmp.eq.s32.totalorder %v324, %v73
    %vm330 = vcmp.eq.s32.totalorder %v324, %v74
    %vm331 = vcmp.eq.s32.totalorder %v324, %v75
    %vm332 = vcmp.eq.s32.totalorder %v324, %v76
    %v333 = vsel %vm325, 1, 0
    %v334 = vsel %vm326, 1, 0
    %v335 = vsel %vm327, 1, 0
    %v336 = vsel %vm328, 1, 0
    %v337 = vsel %vm329, 1, 0
    %v338 = vsel %vm330, 1, 0
    %v339 = vsel %vm331, 1, 0
    %v340 = vsel %vm332, 1, 0
    %v341 = vcvt.s32.f32 %v333
    %v342 = vcvt.s32.f32 %v334
    %v343 = vcvt.s32.f32 %v335
    %v344 = vcvt.s32.f32 %v336
    %v345 = vcvt.s32.f32 %v337
    %v346 = vcvt.s32.f32 %v338
    %v347 = vcvt.s32.f32 %v339
    %v348 = vcvt.s32.f32 %v340
    %v349 = vadd.f32 %v314, %v341
    %v350 = vadd.f32 %v315, %v342
    %v351 = vadd.f32 %v316, %v343
    %v352 = vadd.f32 %v317, %v344
    %v353 = vadd.f32 %v318, %v345
    %v354 = vadd.f32 %v319, %v346
    %v355 = vadd.f32 %v320, %v347
    %v356 = vadd.f32 %v321, %v348
    %357 = vset.pattern.permute.xlu0 8
    %358 = vperm.xlu0 %357, %v57
    %v359 = vpop.permute.xlu0 %358
    %vm360 = vcmp.eq.s32.totalorder %v359, %v69
    %vm361 = vcmp.eq.s32.totalorder %v359, %v70
    %vm362 = vcmp.eq.s32.totalorder %v359, %v71
    %vm363 = vcmp.eq.s32.totalorder %v359, %v72
    %vm364 = vcmp.eq.s32.totalorder %v359, %v73
    %vm365 = vcmp.eq.s32.totalorder %v359, %v74
    %vm366 = vcmp.eq.s32.totalorder %v359, %v75
    %vm367 = vcmp.eq.s32.totalorder %v359, %v76
    %v368 = vsel %vm360, 1, 0
    %v369 = vsel %vm361, 1, 0
    %v370 = vsel %vm362, 1, 0
    %v371 = vsel %vm363, 1, 0
    %v372 = vsel %vm364, 1, 0
    %v373 = vsel %vm365, 1, 0
    %v374 = vsel %vm366, 1, 0
    %v375 = vsel %vm367, 1, 0
    %v376 = vcvt.s32.f32 %v368
    %v377 = vcvt.s32.f32 %v369
    %v378 = vcvt.s32.f32 %v370
    %v379 = vcvt.s32.f32 %v371
    %v380 = vcvt.s32.f32 %v372
    %v381 = vcvt.s32.f32 %v373
    %v382 = vcvt.s32.f32 %v374
    %v383 = vcvt.s32.f32 %v375
    %v384 = vadd.f32 %v349, %v376
    %v385 = vadd.f32 %v350, %v377
    %v386 = vadd.f32 %v351, %v378
    %v387 = vadd.f32 %v352, %v379
    %v388 = vadd.f32 %v353, %v380
    %v389 = vadd.f32 %v354, %v381
    %v390 = vadd.f32 %v355, %v382
    %v391 = vadd.f32 %v356, %v383
    %392 = vset.pattern.permute.xlu0 9
    %393 = vperm.xlu0 %392, %v57
    %v394 = vpop.permute.xlu0 %393
    %vm395 = vcmp.eq.s32.totalorder %v394, %v69
    %vm396 = vcmp.eq.s32.totalorder %v394, %v70
    %vm397 = vcmp.eq.s32.totalorder %v394, %v71
    %vm398 = vcmp.eq.s32.totalorder %v394, %v72
    %vm399 = vcmp.eq.s32.totalorder %v394, %v73
    %vm400 = vcmp.eq.s32.totalorder %v394, %v74
    %vm401 = vcmp.eq.s32.totalorder %v394, %v75
    %vm402 = vcmp.eq.s32.totalorder %v394, %v76
    %v403 = vsel %vm395, 1, 0
    %v404 = vsel %vm396, 1, 0
    %v405 = vsel %vm397, 1, 0
    %v406 = vsel %vm398, 1, 0
    %v407 = vsel %vm399, 1, 0
    %v408 = vsel %vm400, 1, 0
    %v409 = vsel %vm401, 1, 0
    %v410 = vsel %vm402, 1, 0
    %v411 = vcvt.s32.f32 %v403
    %v412 = vcvt.s32.f32 %v404
    %v413 = vcvt.s32.f32 %v405
    %v414 = vcvt.s32.f32 %v406
    %v415 = vcvt.s32.f32 %v407
    %v416 = vcvt.s32.f32 %v408
    %v417 = vcvt.s32.f32 %v409
    %v418 = vcvt.s32.f32 %v410
    %v419 = vadd.f32 %v384, %v411
    %v420 = vadd.f32 %v385, %v412
    %v421 = vadd.f32 %v386, %v413
    %v422 = vadd.f32 %v387, %v414
    %v423 = vadd.f32 %v388, %v415
    %v424 = vadd.f32 %v389, %v416
    %v425 = vadd.f32 %v390, %v417
    %v426 = vadd.f32 %v391, %v418
    %427 = vset.pattern.permute.xlu0 10
    %428 = vperm.xlu0 %427, %v57
    %v429 = vpop.permute.xlu0 %428
    %vm430 = vcmp.eq.s32.totalorder %v429, %v69
    %vm431 = vcmp.eq.s32.totalorder %v429, %v70
    %vm432 = vcmp.eq.s32.totalorder %v429, %v71
    %vm433 = vcmp.eq.s32.totalorder %v429, %v72
    %vm434 = vcmp.eq.s32.totalorder %v429, %v73
    %vm435 = vcmp.eq.s32.totalorder %v429, %v74
    %vm436 = vcmp.eq.s32.totalorder %v429, %v75
    %vm437 = vcmp.eq.s32.totalorder %v429, %v76
    %v438 = vsel %vm430, 1, 0
    %v439 = vsel %vm431, 1, 0
    %v440 = vsel %vm432, 1, 0
    %v441 = vsel %vm433, 1, 0
    %v442 = vsel %vm434, 1, 0
    %v443 = vsel %vm435, 1, 0
    %v444 = vsel %vm436, 1, 0
    %v445 = vsel %vm437, 1, 0
    %v446 = vcvt.s32.f32 %v438
    %v447 = vcvt.s32.f32 %v439
    %v448 = vcvt.s32.f32 %v440
    %v449 = vcvt.s32.f32 %v441
    %v450 = vcvt.s32.f32 %v442
    %v451 = vcvt.s32.f32 %v443
    %v452 = vcvt.s32.f32 %v444
    %v453 = vcvt.s32.f32 %v445
    %v454 = vadd.f32 %v419, %v446
    %v455 = vadd.f32 %v420, %v447
    %v456 = vadd.f32 %v421, %v448
    %v457 = vadd.f32 %v422, %v449
    %v458 = vadd.f32 %v423, %v450
    %v459 = vadd.f32 %v424, %v451
    %v460 = vadd.f32 %v425, %v452
    %v461 = vadd.f32 %v426, %v453
    %462 = vset.pattern.permute.xlu0 11
    %463 = vperm.xlu0 %462, %v57
    %v464 = vpop.permute.xlu0 %463
    %vm465 = vcmp.eq.s32.totalorder %v464, %v69
    %vm466 = vcmp.eq.s32.totalorder %v464, %v70
    %vm467 = vcmp.eq.s32.totalorder %v464, %v71
    %vm468 = vcmp.eq.s32.totalorder %v464, %v72
    %vm469 = vcmp.eq.s32.totalorder %v464, %v73
    %vm470 = vcmp.eq.s32.totalorder %v464, %v74
    %vm471 = vcmp.eq.s32.totalorder %v464, %v75
    %vm472 = vcmp.eq.s32.totalorder %v464, %v76
    %v473 = vsel %vm465, 1, 0
    %v474 = vsel %vm466, 1, 0
    %v475 = vsel %vm467, 1, 0
    %v476 = vsel %vm468, 1, 0
    %v477 = vsel %vm469, 1, 0
    %v478 = vsel %vm470, 1, 0
    %v479 = vsel %vm471, 1, 0
    %v480 = vsel %vm472, 1, 0
    %v481 = vcvt.s32.f32 %v473
    %v482 = vcvt.s32.f32 %v474
    %v483 = vcvt.s32.f32 %v475
    %v484 = vcvt.s32.f32 %v476
    %v485 = vcvt.s32.f32 %v477
    %v486 = vcvt.s32.f32 %v478
    %v487 = vcvt.s32.f32 %v479
    %v488 = vcvt.s32.f32 %v480
    %v489 = vadd.f32 %v454, %v481
    %v490 = vadd.f32 %v455, %v482
    %v491 = vadd.f32 %v456, %v483
    %v492 = vadd.f32 %v457, %v484
    %v493 = vadd.f32 %v458, %v485
    %v494 = vadd.f32 %v459, %v486
    %v495 = vadd.f32 %v460, %v487
    %v496 = vadd.f32 %v461, %v488
    %497 = vset.pattern.permute.xlu0 12
    %498 = vperm.xlu0 %497, %v57
    %v499 = vpop.permute.xlu0 %498
    %vm500 = vcmp.eq.s32.totalorder %v499, %v69
    %vm501 = vcmp.eq.s32.totalorder %v499, %v70
    %vm502 = vcmp.eq.s32.totalorder %v499, %v71
    %vm503 = vcmp.eq.s32.totalorder %v499, %v72
    %vm504 = vcmp.eq.s32.totalorder %v499, %v73
    %vm505 = vcmp.eq.s32.totalorder %v499, %v74
    %vm506 = vcmp.eq.s32.totalorder %v499, %v75
    %vm507 = vcmp.eq.s32.totalorder %v499, %v76
    %v508 = vsel %vm500, 1, 0
    %v509 = vsel %vm501, 1, 0
    %v510 = vsel %vm502, 1, 0
    %v511 = vsel %vm503, 1, 0
    %v512 = vsel %vm504, 1, 0
    %v513 = vsel %vm505, 1, 0
    %v514 = vsel %vm506, 1, 0
    %v515 = vsel %vm507, 1, 0
    %v516 = vcvt.s32.f32 %v508
    %v517 = vcvt.s32.f32 %v509
    %v518 = vcvt.s32.f32 %v510
    %v519 = vcvt.s32.f32 %v511
    %v520 = vcvt.s32.f32 %v512
    %v521 = vcvt.s32.f32 %v513
    %v522 = vcvt.s32.f32 %v514
    %v523 = vcvt.s32.f32 %v515
    %v524 = vadd.f32 %v489, %v516
    %v525 = vadd.f32 %v490, %v517
    %v526 = vadd.f32 %v491, %v518
    %v527 = vadd.f32 %v492, %v519
    %v528 = vadd.f32 %v493, %v520
    %v529 = vadd.f32 %v494, %v521
    %v530 = vadd.f32 %v495, %v522
    %v531 = vadd.f32 %v496, %v523
    %532 = vset.pattern.permute.xlu0 13
    %533 = vperm.xlu0 %532, %v57
    %v534 = vpop.permute.xlu0 %533
    %vm535 = vcmp.eq.s32.totalorder %v534, %v69
    %vm536 = vcmp.eq.s32.totalorder %v534, %v70
    %vm537 = vcmp.eq.s32.totalorder %v534, %v71
    %vm538 = vcmp.eq.s32.totalorder %v534, %v72
    %vm539 = vcmp.eq.s32.totalorder %v534, %v73
    %vm540 = vcmp.eq.s32.totalorder %v534, %v74
    %vm541 = vcmp.eq.s32.totalorder %v534, %v75
    %vm542 = vcmp.eq.s32.totalorder %v534, %v76
    %v543 = vsel %vm535, 1, 0
    %v544 = vsel %vm536, 1, 0
    %v545 = vsel %vm537, 1, 0
    %v546 = vsel %vm538, 1, 0
    %v547 = vsel %vm539, 1, 0
    %v548 = vsel %vm540, 1, 0
    %v549 = vsel %vm541, 1, 0
    %v550 = vsel %vm542, 1, 0
    %v551 = vcvt.s32.f32 %v543
    %v552 = vcvt.s32.f32 %v544
    %v553 = vcvt.s32.f32 %v545
    %v554 = vcvt.s32.f32 %v546
    %v555 = vcvt.s32.f32 %v547
    %v556 = vcvt.s32.f32 %v548
    %v557 = vcvt.s32.f32 %v549
    %v558 = vcvt.s32.f32 %v550
    %v559 = vadd.f32 %v524, %v551
    %v560 = vadd.f32 %v525, %v552
    %v561 = vadd.f32 %v526, %v553
    %v562 = vadd.f32 %v527, %v554
    %v563 = vadd.f32 %v528, %v555
    %v564 = vadd.f32 %v529, %v556
    %v565 = vadd.f32 %v530, %v557
    %v566 = vadd.f32 %v531, %v558
    %567 = vset.pattern.permute.xlu0 14
    %568 = vperm.xlu0 %567, %v57
    %v569 = vpop.permute.xlu0 %568
    %vm570 = vcmp.eq.s32.totalorder %v569, %v69
    %vm571 = vcmp.eq.s32.totalorder %v569, %v70
    %vm572 = vcmp.eq.s32.totalorder %v569, %v71
    %vm573 = vcmp.eq.s32.totalorder %v569, %v72
    %vm574 = vcmp.eq.s32.totalorder %v569, %v73
    %vm575 = vcmp.eq.s32.totalorder %v569, %v74
    %vm576 = vcmp.eq.s32.totalorder %v569, %v75
    %vm577 = vcmp.eq.s32.totalorder %v569, %v76
    %v578 = vsel %vm570, 1, 0
    %v579 = vsel %vm571, 1, 0
    %v580 = vsel %vm572, 1, 0
    %v581 = vsel %vm573, 1, 0
    %v582 = vsel %vm574, 1, 0
    %v583 = vsel %vm575, 1, 0
    %v584 = vsel %vm576, 1, 0
    %v585 = vsel %vm577, 1, 0
    %v586 = vcvt.s32.f32 %v578
    %v587 = vcvt.s32.f32 %v579
    %v588 = vcvt.s32.f32 %v580
    %v589 = vcvt.s32.f32 %v581
    %v590 = vcvt.s32.f32 %v582
    %v591 = vcvt.s32.f32 %v583
    %v592 = vcvt.s32.f32 %v584
    %v593 = vcvt.s32.f32 %v585
    %v594 = vadd.f32 %v559, %v586
    %v595 = vadd.f32 %v560, %v587
    %v596 = vadd.f32 %v561, %v588
    %v597 = vadd.f32 %v562, %v589
    %v598 = vadd.f32 %v563, %v590
    %v599 = vadd.f32 %v564, %v591
    %v600 = vadd.f32 %v565, %v592
    %v601 = vadd.f32 %v566, %v593
    %602 = vset.pattern.permute.xlu0 15
    %603 = vperm.xlu0 %602, %v57
    %v604 = vpop.permute.xlu0 %603
    %vm605 = vcmp.eq.s32.totalorder %v604, %v69
    %vm606 = vcmp.eq.s32.totalorder %v604, %v70
    %vm607 = vcmp.eq.s32.totalorder %v604, %v71
    %vm608 = vcmp.eq.s32.totalorder %v604, %v72
    %vm609 = vcmp.eq.s32.totalorder %v604, %v73
    %vm610 = vcmp.eq.s32.totalorder %v604, %v74
    %vm611 = vcmp.eq.s32.totalorder %v604, %v75
    %vm612 = vcmp.eq.s32.totalorder %v604, %v76
    %v613 = vsel %vm605, 1, 0
    %v614 = vsel %vm606, 1, 0
    %v615 = vsel %vm607, 1, 0
    %v616 = vsel %vm608, 1, 0
    %v617 = vsel %vm609, 1, 0
    %v618 = vsel %vm610, 1, 0
    %v619 = vsel %vm611, 1, 0
    %v620 = vsel %vm612, 1, 0
    %v621 = vcvt.s32.f32 %v613
    %v622 = vcvt.s32.f32 %v614
    %v623 = vcvt.s32.f32 %v615
    %v624 = vcvt.s32.f32 %v616
    %v625 = vcvt.s32.f32 %v617
    %v626 = vcvt.s32.f32 %v618
    %v627 = vcvt.s32.f32 %v619
    %v628 = vcvt.s32.f32 %v620
    %v629 = vadd.f32 %v594, %v621
    %v630 = vadd.f32 %v595, %v622
    %v631 = vadd.f32 %v596, %v623
    %v632 = vadd.f32 %v597, %v624
    %v633 = vadd.f32 %v598, %v625
    %v634 = vadd.f32 %v599, %v626
    %v635 = vadd.f32 %v600, %v627
    %v636 = vadd.f32 %v601, %v628
    %637 = vset.pattern.permute.xlu0 16
    %638 = vperm.xlu0 %637, %v57
    %v639 = vpop.permute.xlu0 %638
    %vm640 = vcmp.eq.s32.totalorder %v639, %v69
    %vm641 = vcmp.eq.s32.totalorder %v639, %v70
    %vm642 = vcmp.eq.s32.totalorder %v639, %v71
    %vm643 = vcmp.eq.s32.totalorder %v639, %v72
    %vm644 = vcmp.eq.s32.totalorder %v639, %v73
    %vm645 = vcmp.eq.s32.totalorder %v639, %v74
    %vm646 = vcmp.eq.s32.totalorder %v639, %v75
    %vm647 = vcmp.eq.s32.totalorder %v639, %v76
    %v648 = vsel %vm640, 1, 0
    %v649 = vsel %vm641, 1, 0
    %v650 = vsel %vm642, 1, 0
    %v651 = vsel %vm643, 1, 0
    %v652 = vsel %vm644, 1, 0
    %v653 = vsel %vm645, 1, 0
    %v654 = vsel %vm646, 1, 0
    %v655 = vsel %vm647, 1, 0
    %v656 = vcvt.s32.f32 %v648
    %v657 = vcvt.s32.f32 %v649
    %v658 = vcvt.s32.f32 %v650
    %v659 = vcvt.s32.f32 %v651
    %v660 = vcvt.s32.f32 %v652
    %v661 = vcvt.s32.f32 %v653
    %v662 = vcvt.s32.f32 %v654
    %v663 = vcvt.s32.f32 %v655
    %v664 = vadd.f32 %v629, %v656
    %v665 = vadd.f32 %v630, %v657
    %v666 = vadd.f32 %v631, %v658
    %v667 = vadd.f32 %v632, %v659
    %v668 = vadd.f32 %v633, %v660
    %v669 = vadd.f32 %v634, %v661
    %v670 = vadd.f32 %v635, %v662
    %v671 = vadd.f32 %v636, %v663
    %672 = vset.pattern.permute.xlu0 17
    %673 = vperm.xlu0 %672, %v57
    %v674 = vpop.permute.xlu0 %673
    %vm675 = vcmp.eq.s32.totalorder %v674, %v69
    %vm676 = vcmp.eq.s32.totalorder %v674, %v70
    %vm677 = vcmp.eq.s32.totalorder %v674, %v71
    %vm678 = vcmp.eq.s32.totalorder %v674, %v72
    %vm679 = vcmp.eq.s32.totalorder %v674, %v73
    %vm680 = vcmp.eq.s32.totalorder %v674, %v74
    %vm681 = vcmp.eq.s32.totalorder %v674, %v75
    %vm682 = vcmp.eq.s32.totalorder %v674, %v76
    %v683 = vsel %vm675, 1, 0
    %v684 = vsel %vm676, 1, 0
    %v685 = vsel %vm677, 1, 0
    %v686 = vsel %vm678, 1, 0
    %v687 = vsel %vm679, 1, 0
    %v688 = vsel %vm680, 1, 0
    %v689 = vsel %vm681, 1, 0
    %v690 = vsel %vm682, 1, 0
    %v691 = vcvt.s32.f32 %v683
    %v692 = vcvt.s32.f32 %v684
    %v693 = vcvt.s32.f32 %v685
    %v694 = vcvt.s32.f32 %v686
    %v695 = vcvt.s32.f32 %v687
    %v696 = vcvt.s32.f32 %v688
    %v697 = vcvt.s32.f32 %v689
    %v698 = vcvt.s32.f32 %v690
    %v699 = vadd.f32 %v664, %v691
    %v700 = vadd.f32 %v665, %v692
    %v701 = vadd.f32 %v666, %v693
    %v702 = vadd.f32 %v667, %v694
    %v703 = vadd.f32 %v668, %v695
    %v704 = vadd.f32 %v669, %v696
    %v705 = vadd.f32 %v670, %v697
    %v706 = vadd.f32 %v671, %v698
    %707 = vset.pattern.permute.xlu0 18
    %708 = vperm.xlu0 %707, %v57
    %v709 = vpop.permute.xlu0 %708
    %vm710 = vcmp.eq.s32.totalorder %v709, %v69
    %vm711 = vcmp.eq.s32.totalorder %v709, %v70
    %vm712 = vcmp.eq.s32.totalorder %v709, %v71
    %vm713 = vcmp.eq.s32.totalorder %v709, %v72
    %vm714 = vcmp.eq.s32.totalorder %v709, %v73
    %vm715 = vcmp.eq.s32.totalorder %v709, %v74
    %vm716 = vcmp.eq.s32.totalorder %v709, %v75
    %vm717 = vcmp.eq.s32.totalorder %v709, %v76
    %v718 = vsel %vm710, 1, 0
    %v719 = vsel %vm711, 1, 0
    %v720 = vsel %vm712, 1, 0
    %v721 = vsel %vm713, 1, 0
    %v722 = vsel %vm714, 1, 0
    %v723 = vsel %vm715, 1, 0
    %v724 = vsel %vm716, 1, 0
    %v725 = vsel %vm717, 1, 0
    %v726 = vcvt.s32.f32 %v718
    %v727 = vcvt.s32.f32 %v719
    %v728 = vcvt.s32.f32 %v720
    %v729 = vcvt.s32.f32 %v721
    %v730 = vcvt.s32.f32 %v722
    %v731 = vcvt.s32.f32 %v723
    %v732 = vcvt.s32.f32 %v724
    %v733 = vcvt.s32.f32 %v725
    %v734 = vadd.f32 %v699, %v726
    %v735 = vadd.f32 %v700, %v727
    %v736 = vadd.f32 %v701, %v728
    %v737 = vadd.f32 %v702, %v729
    %v738 = vadd.f32 %v703, %v730
    %v739 = vadd.f32 %v704, %v731
    %v740 = vadd.f32 %v705, %v732
    %v741 = vadd.f32 %v706, %v733
    %742 = vset.pattern.permute.xlu0 19
    %743 = vperm.xlu0 %742, %v57
    %v744 = vpop.permute.xlu0 %743
    %vm745 = vcmp.eq.s32.totalorder %v744, %v69
    %vm746 = vcmp.eq.s32.totalorder %v744, %v70
    %vm747 = vcmp.eq.s32.totalorder %v744, %v71
    %vm748 = vcmp.eq.s32.totalorder %v744, %v72
    %vm749 = vcmp.eq.s32.totalorder %v744, %v73
    %vm750 = vcmp.eq.s32.totalorder %v744, %v74
    %vm751 = vcmp.eq.s32.totalorder %v744, %v75
    %vm752 = vcmp.eq.s32.totalorder %v744, %v76
    %v753 = vsel %vm745, 1, 0
    %v754 = vsel %vm746, 1, 0
    %v755 = vsel %vm747, 1, 0
    %v756 = vsel %vm748, 1, 0
    %v757 = vsel %vm749, 1, 0
    %v758 = vsel %vm750, 1, 0
    %v759 = vsel %vm751, 1, 0
    %v760 = vsel %vm752, 1, 0
    %v761 = vcvt.s32.f32 %v753
    %v762 = vcvt.s32.f32 %v754
    %v763 = vcvt.s32.f32 %v755
    %v764 = vcvt.s32.f32 %v756
    %v765 = vcvt.s32.f32 %v757
    %v766 = vcvt.s32.f32 %v758
    %v767 = vcvt.s32.f32 %v759
    %v768 = vcvt.s32.f32 %v760
    %v769 = vadd.f32 %v734, %v761
    %v770 = vadd.f32 %v735, %v762
    %v771 = vadd.f32 %v736, %v763
    %v772 = vadd.f32 %v737, %v764
    %v773 = vadd.f32 %v738, %v765
    %v774 = vadd.f32 %v739, %v766
    %v775 = vadd.f32 %v740, %v767
    %v776 = vadd.f32 %v741, %v768
    %777 = vset.pattern.permute.xlu0 20
    %778 = vperm.xlu0 %777, %v57
    %v779 = vpop.permute.xlu0 %778
    %vm780 = vcmp.eq.s32.totalorder %v779, %v69
    %vm781 = vcmp.eq.s32.totalorder %v779, %v70
    %vm782 = vcmp.eq.s32.totalorder %v779, %v71
    %vm783 = vcmp.eq.s32.totalorder %v779, %v72
    %vm784 = vcmp.eq.s32.totalorder %v779, %v73
    %vm785 = vcmp.eq.s32.totalorder %v779, %v74
    %vm786 = vcmp.eq.s32.totalorder %v779, %v75
    %vm787 = vcmp.eq.s32.totalorder %v779, %v76
    %v788 = vsel %vm780, 1, 0
    %v789 = vsel %vm781, 1, 0
    %v790 = vsel %vm782, 1, 0
    %v791 = vsel %vm783, 1, 0
    %v792 = vsel %vm784, 1, 0
    %v793 = vsel %vm785, 1, 0
    %v794 = vsel %vm786, 1, 0
    %v795 = vsel %vm787, 1, 0
    %v796 = vcvt.s32.f32 %v788
    %v797 = vcvt.s32.f32 %v789
    %v798 = vcvt.s32.f32 %v790
    %v799 = vcvt.s32.f32 %v791
    %v800 = vcvt.s32.f32 %v792
    %v801 = vcvt.s32.f32 %v793
    %v802 = vcvt.s32.f32 %v794
    %v803 = vcvt.s32.f32 %v795
    %v804 = vadd.f32 %v769, %v796
    %v805 = vadd.f32 %v770, %v797
    %v806 = vadd.f32 %v771, %v798
    %v807 = vadd.f32 %v772, %v799
    %v808 = vadd.f32 %v773, %v800
    %v809 = vadd.f32 %v774, %v801
    %v810 = vadd.f32 %v775, %v802
    %v811 = vadd.f32 %v776, %v803
    %812 = vset.pattern.permute.xlu0 21
    %813 = vperm.xlu0 %812, %v57
    %v814 = vpop.permute.xlu0 %813
    %vm815 = vcmp.eq.s32.totalorder %v814, %v69
    %vm816 = vcmp.eq.s32.totalorder %v814, %v70
    %vm817 = vcmp.eq.s32.totalorder %v814, %v71
    %vm818 = vcmp.eq.s32.totalorder %v814, %v72
    %vm819 = vcmp.eq.s32.totalorder %v814, %v73
    %vm820 = vcmp.eq.s32.totalorder %v814, %v74
    %vm821 = vcmp.eq.s32.totalorder %v814, %v75
    %vm822 = vcmp.eq.s32.totalorder %v814, %v76
    %v823 = vsel %vm815, 1, 0
    %v824 = vsel %vm816, 1, 0
    %v825 = vsel %vm817, 1, 0
    %v826 = vsel %vm818, 1, 0
    %v827 = vsel %vm819, 1, 0
    %v828 = vsel %vm820, 1, 0
    %v829 = vsel %vm821, 1, 0
    %v830 = vsel %vm822, 1, 0
    %v831 = vcvt.s32.f32 %v823
    %v832 = vcvt.s32.f32 %v824
    %v833 = vcvt.s32.f32 %v825
    %v834 = vcvt.s32.f32 %v826
    %v835 = vcvt.s32.f32 %v827
    %v836 = vcvt.s32.f32 %v828
    %v837 = vcvt.s32.f32 %v829
    %v838 = vcvt.s32.f32 %v830
    %v839 = vadd.f32 %v804, %v831
    %v840 = vadd.f32 %v805, %v832
    %v841 = vadd.f32 %v806, %v833
    %v842 = vadd.f32 %v807, %v834
    %v843 = vadd.f32 %v808, %v835
    %v844 = vadd.f32 %v809, %v836
    %v845 = vadd.f32 %v810, %v837
    %v846 = vadd.f32 %v811, %v838
    %847 = vset.pattern.permute.xlu0 22
    %848 = vperm.xlu0 %847, %v57
    %v849 = vpop.permute.xlu0 %848
    %vm850 = vcmp.eq.s32.totalorder %v849, %v69
    %vm851 = vcmp.eq.s32.totalorder %v849, %v70
    %vm852 = vcmp.eq.s32.totalorder %v849, %v71
    %vm853 = vcmp.eq.s32.totalorder %v849, %v72
    %vm854 = vcmp.eq.s32.totalorder %v849, %v73
    %vm855 = vcmp.eq.s32.totalorder %v849, %v74
    %vm856 = vcmp.eq.s32.totalorder %v849, %v75
    %vm857 = vcmp.eq.s32.totalorder %v849, %v76
    %v858 = vsel %vm850, 1, 0
    %v859 = vsel %vm851, 1, 0
    %v860 = vsel %vm852, 1, 0
    %v861 = vsel %vm853, 1, 0
    %v862 = vsel %vm854, 1, 0
    %v863 = vsel %vm855, 1, 0
    %v864 = vsel %vm856, 1, 0
    %v865 = vsel %vm857, 1, 0
    %v866 = vcvt.s32.f32 %v858
    %v867 = vcvt.s32.f32 %v859
    %v868 = vcvt.s32.f32 %v860
    %v869 = vcvt.s32.f32 %v861
    %v870 = vcvt.s32.f32 %v862
    %v871 = vcvt.s32.f32 %v863
    %v872 = vcvt.s32.f32 %v864
    %v873 = vcvt.s32.f32 %v865
    %v874 = vadd.f32 %v839, %v866
    %v875 = vadd.f32 %v840, %v867
    %v876 = vadd.f32 %v841, %v868
    %v877 = vadd.f32 %v842, %v869
    %v878 = vadd.f32 %v843, %v870
    %v879 = vadd.f32 %v844, %v871
    %v880 = vadd.f32 %v845, %v872
    %v881 = vadd.f32 %v846, %v873
    %882 = vset.pattern.permute.xlu0 23
    %883 = vperm.xlu0 %882, %v57
    %v884 = vpop.permute.xlu0 %883
    %vm885 = vcmp.eq.s32.totalorder %v884, %v69
    %vm886 = vcmp.eq.s32.totalorder %v884, %v70
    %vm887 = vcmp.eq.s32.totalorder %v884, %v71
    %vm888 = vcmp.eq.s32.totalorder %v884, %v72
    %vm889 = vcmp.eq.s32.totalorder %v884, %v73
    %vm890 = vcmp.eq.s32.totalorder %v884, %v74
    %vm891 = vcmp.eq.s32.totalorder %v884, %v75
    %vm892 = vcmp.eq.s32.totalorder %v884, %v76
    %v893 = vsel %vm885, 1, 0
    %v894 = vsel %vm886, 1, 0
    %v895 = vsel %vm887, 1, 0
    %v896 = vsel %vm888, 1, 0
    %v897 = vsel %vm889, 1, 0
    %v898 = vsel %vm890, 1, 0
    %v899 = vsel %vm891, 1, 0
    %v900 = vsel %vm892, 1, 0
    %v901 = vcvt.s32.f32 %v893
    %v902 = vcvt.s32.f32 %v894
    %v903 = vcvt.s32.f32 %v895
    %v904 = vcvt.s32.f32 %v896
    %v905 = vcvt.s32.f32 %v897
    %v906 = vcvt.s32.f32 %v898
    %v907 = vcvt.s32.f32 %v899
    %v908 = vcvt.s32.f32 %v900
    %v909 = vadd.f32 %v874, %v901
    %v910 = vadd.f32 %v875, %v902
    %v911 = vadd.f32 %v876, %v903
    %v912 = vadd.f32 %v877, %v904
    %v913 = vadd.f32 %v878, %v905
    %v914 = vadd.f32 %v879, %v906
    %v915 = vadd.f32 %v880, %v907
    %v916 = vadd.f32 %v881, %v908
    %917 = vset.pattern.permute.xlu0 24
    %918 = vperm.xlu0 %917, %v57
    %v919 = vpop.permute.xlu0 %918
    %vm920 = vcmp.eq.s32.totalorder %v919, %v69
    %vm921 = vcmp.eq.s32.totalorder %v919, %v70
    %vm922 = vcmp.eq.s32.totalorder %v919, %v71
    %vm923 = vcmp.eq.s32.totalorder %v919, %v72
    %vm924 = vcmp.eq.s32.totalorder %v919, %v73
    %vm925 = vcmp.eq.s32.totalorder %v919, %v74
    %vm926 = vcmp.eq.s32.totalorder %v919, %v75
    %vm927 = vcmp.eq.s32.totalorder %v919, %v76
    %v928 = vsel %vm920, 1, 0
    %v929 = vsel %vm921, 1, 0
    %v930 = vsel %vm922, 1, 0
    %v931 = vsel %vm923, 1, 0
    %v932 = vsel %vm924, 1, 0
    %v933 = vsel %vm925, 1, 0
    %v934 = vsel %vm926, 1, 0
    %v935 = vsel %vm927, 1, 0
    %v936 = vcvt.s32.f32 %v928
    %v937 = vcvt.s32.f32 %v929
    %v938 = vcvt.s32.f32 %v930
    %v939 = vcvt.s32.f32 %v931
    %v940 = vcvt.s32.f32 %v932
    %v941 = vcvt.s32.f32 %v933
    %v942 = vcvt.s32.f32 %v934
    %v943 = vcvt.s32.f32 %v935
    %v944 = vadd.f32 %v909, %v936
    %v945 = vadd.f32 %v910, %v937
    %v946 = vadd.f32 %v911, %v938
    %v947 = vadd.f32 %v912, %v939
    %v948 = vadd.f32 %v913, %v940
    %v949 = vadd.f32 %v914, %v941
    %v950 = vadd.f32 %v915, %v942
    %v951 = vadd.f32 %v916, %v943
    %952 = vset.pattern.permute.xlu0 25
    %953 = vperm.xlu0 %952, %v57
    %v954 = vpop.permute.xlu0 %953
    %vm955 = vcmp.eq.s32.totalorder %v954, %v69
    %vm956 = vcmp.eq.s32.totalorder %v954, %v70
    %vm957 = vcmp.eq.s32.totalorder %v954, %v71
    %vm958 = vcmp.eq.s32.totalorder %v954, %v72
    %vm959 = vcmp.eq.s32.totalorder %v954, %v73
    %vm960 = vcmp.eq.s32.totalorder %v954, %v74
    %vm961 = vcmp.eq.s32.totalorder %v954, %v75
    %vm962 = vcmp.eq.s32.totalorder %v954, %v76
    %v963 = vsel %vm955, 1, 0
    %v964 = vsel %vm956, 1, 0
    %v965 = vsel %vm957, 1, 0
    %v966 = vsel %vm958, 1, 0
    %v967 = vsel %vm959, 1, 0
    %v968 = vsel %vm960, 1, 0
    %v969 = vsel %vm961, 1, 0
    %v970 = vsel %vm962, 1, 0
    %v971 = vcvt.s32.f32 %v963
    %v972 = vcvt.s32.f32 %v964
    %v973 = vcvt.s32.f32 %v965
    %v974 = vcvt.s32.f32 %v966
    %v975 = vcvt.s32.f32 %v967
    %v976 = vcvt.s32.f32 %v968
    %v977 = vcvt.s32.f32 %v969
    %v978 = vcvt.s32.f32 %v970
    %v979 = vadd.f32 %v944, %v971
    %v980 = vadd.f32 %v945, %v972
    %v981 = vadd.f32 %v946, %v973
    %v982 = vadd.f32 %v947, %v974
    %v983 = vadd.f32 %v948, %v975
    %v984 = vadd.f32 %v949, %v976
    %v985 = vadd.f32 %v950, %v977
    %v986 = vadd.f32 %v951, %v978
    %987 = vset.pattern.permute.xlu0 26
    %988 = vperm.xlu0 %987, %v57
    %v989 = vpop.permute.xlu0 %988
    %vm990 = vcmp.eq.s32.totalorder %v989, %v69
    %vm991 = vcmp.eq.s32.totalorder %v989, %v70
    %vm992 = vcmp.eq.s32.totalorder %v989, %v71
    %vm993 = vcmp.eq.s32.totalorder %v989, %v72
    %vm994 = vcmp.eq.s32.totalorder %v989, %v73
    %vm995 = vcmp.eq.s32.totalorder %v989, %v74
    %vm996 = vcmp.eq.s32.totalorder %v989, %v75
    %vm997 = vcmp.eq.s32.totalorder %v989, %v76
    %v998 = vsel %vm990, 1, 0
    %v999 = vsel %vm991, 1, 0
    %v1000 = vsel %vm992, 1, 0
    %v1001 = vsel %vm993, 1, 0
    %v1002 = vsel %vm994, 1, 0
    %v1003 = vsel %vm995, 1, 0
    %v1004 = vsel %vm996, 1, 0
    %v1005 = vsel %vm997, 1, 0
    %v1006 = vcvt.s32.f32 %v998
    %v1007 = vcvt.s32.f32 %v999
    %v1008 = vcvt.s32.f32 %v1000
    %v1009 = vcvt.s32.f32 %v1001
    %v1010 = vcvt.s32.f32 %v1002
    %v1011 = vcvt.s32.f32 %v1003
    %v1012 = vcvt.s32.f32 %v1004
    %v1013 = vcvt.s32.f32 %v1005
    %v1014 = vadd.f32 %v979, %v1006
    %v1015 = vadd.f32 %v980, %v1007
    %v1016 = vadd.f32 %v981, %v1008
    %v1017 = vadd.f32 %v982, %v1009
    %v1018 = vadd.f32 %v983, %v1010
    %v1019 = vadd.f32 %v984, %v1011
    %v1020 = vadd.f32 %v985, %v1012
    %v1021 = vadd.f32 %v986, %v1013
    %1022 = vset.pattern.permute.xlu0 27
    %1023 = vperm.xlu0 %1022, %v57
    %v1024 = vpop.permute.xlu0 %1023
    %vm1025 = vcmp.eq.s32.totalorder %v1024, %v69
    %vm1026 = vcmp.eq.s32.totalorder %v1024, %v70
    %vm1027 = vcmp.eq.s32.totalorder %v1024, %v71
    %vm1028 = vcmp.eq.s32.totalorder %v1024, %v72
    %vm1029 = vcmp.eq.s32.totalorder %v1024, %v73
    %vm1030 = vcmp.eq.s32.totalorder %v1024, %v74
    %vm1031 = vcmp.eq.s32.totalorder %v1024, %v75
    %vm1032 = vcmp.eq.s32.totalorder %v1024, %v76
    %v1033 = vsel %vm1025, 1, 0
    %v1034 = vsel %vm1026, 1, 0
    %v1035 = vsel %vm1027, 1, 0
    %v1036 = vsel %vm1028, 1, 0
    %v1037 = vsel %vm1029, 1, 0
    %v1038 = vsel %vm1030, 1, 0
    %v1039 = vsel %vm1031, 1, 0
    %v1040 = vsel %vm1032, 1, 0
    %v1041 = vcvt.s32.f32 %v1033
    %v1042 = vcvt.s32.f32 %v1034
    %v1043 = vcvt.s32.f32 %v1035
    %v1044 = vcvt.s32.f32 %v1036
    %v1045 = vcvt.s32.f32 %v1037
    %v1046 = vcvt.s32.f32 %v1038
    %v1047 = vcvt.s32.f32 %v1039
    %v1048 = vcvt.s32.f32 %v1040
    %v1049 = vadd.f32 %v1014, %v1041
    %v1050 = vadd.f32 %v1015, %v1042
    %v1051 = vadd.f32 %v1016, %v1043
    %v1052 = vadd.f32 %v1017, %v1044
    %v1053 = vadd.f32 %v1018, %v1045
    %v1054 = vadd.f32 %v1019, %v1046
    %v1055 = vadd.f32 %v1020, %v1047
    %v1056 = vadd.f32 %v1021, %v1048
    %1057 = vset.pattern.permute.xlu0 28
    %1058 = vperm.xlu0 %1057, %v57
    %v1059 = vpop.permute.xlu0 %1058
    %vm1060 = vcmp.eq.s32.totalorder %v1059, %v69
    %vm1061 = vcmp.eq.s32.totalorder %v1059, %v70
    %vm1062 = vcmp.eq.s32.totalorder %v1059, %v71
    %vm1063 = vcmp.eq.s32.totalorder %v1059, %v72
    %vm1064 = vcmp.eq.s32.totalorder %v1059, %v73
    %vm1065 = vcmp.eq.s32.totalorder %v1059, %v74
    %vm1066 = vcmp.eq.s32.totalorder %v1059, %v75
    %vm1067 = vcmp.eq.s32.totalorder %v1059, %v76
    %v1068 = vsel %vm1060, 1, 0
    %v1069 = vsel %vm1061, 1, 0
    %v1070 = vsel %vm1062, 1, 0
    %v1071 = vsel %vm1063, 1, 0
    %v1072 = vsel %vm1064, 1, 0
    %v1073 = vsel %vm1065, 1, 0
    %v1074 = vsel %vm1066, 1, 0
    %v1075 = vsel %vm1067, 1, 0
    %v1076 = vcvt.s32.f32 %v1068
    %v1077 = vcvt.s32.f32 %v1069
    %v1078 = vcvt.s32.f32 %v1070
    %v1079 = vcvt.s32.f32 %v1071
    %v1080 = vcvt.s32.f32 %v1072
    %v1081 = vcvt.s32.f32 %v1073
    %v1082 = vcvt.s32.f32 %v1074
    %v1083 = vcvt.s32.f32 %v1075
    %v1084 = vadd.f32 %v1049, %v1076
    %v1085 = vadd.f32 %v1050, %v1077
    %v1086 = vadd.f32 %v1051, %v1078
    %v1087 = vadd.f32 %v1052, %v1079
    %v1088 = vadd.f32 %v1053, %v1080
    %v1089 = vadd.f32 %v1054, %v1081
    %v1090 = vadd.f32 %v1055, %v1082
    %v1091 = vadd.f32 %v1056, %v1083
    %1092 = vset.pattern.permute.xlu0 29
    %1093 = vperm.xlu0 %1092, %v57
    %v1094 = vpop.permute.xlu0 %1093
    %vm1095 = vcmp.eq.s32.totalorder %v1094, %v69
    %vm1096 = vcmp.eq.s32.totalorder %v1094, %v70
    %vm1097 = vcmp.eq.s32.totalorder %v1094, %v71
    %vm1098 = vcmp.eq.s32.totalorder %v1094, %v72
    %vm1099 = vcmp.eq.s32.totalorder %v1094, %v73
    %vm1100 = vcmp.eq.s32.totalorder %v1094, %v74
    %vm1101 = vcmp.eq.s32.totalorder %v1094, %v75
    %vm1102 = vcmp.eq.s32.totalorder %v1094, %v76
    %v1103 = vsel %vm1095, 1, 0
    %v1104 = vsel %vm1096, 1, 0
    %v1105 = vsel %vm1097, 1, 0
    %v1106 = vsel %vm1098, 1, 0
    %v1107 = vsel %vm1099, 1, 0
    %v1108 = vsel %vm1100, 1, 0
    %v1109 = vsel %vm1101, 1, 0
    %v1110 = vsel %vm1102, 1, 0
    %v1111 = vcvt.s32.f32 %v1103
    %v1112 = vcvt.s32.f32 %v1104
    %v1113 = vcvt.s32.f32 %v1105
    %v1114 = vcvt.s32.f32 %v1106
    %v1115 = vcvt.s32.f32 %v1107
    %v1116 = vcvt.s32.f32 %v1108
    %v1117 = vcvt.s32.f32 %v1109
    %v1118 = vcvt.s32.f32 %v1110
    %v1119 = vadd.f32 %v1084, %v1111
    %v1120 = vadd.f32 %v1085, %v1112
    %v1121 = vadd.f32 %v1086, %v1113
    %v1122 = vadd.f32 %v1087, %v1114
    %v1123 = vadd.f32 %v1088, %v1115
    %v1124 = vadd.f32 %v1089, %v1116
    %v1125 = vadd.f32 %v1090, %v1117
    %v1126 = vadd.f32 %v1091, %v1118
    %1127 = vset.pattern.permute.xlu0 30
    %1128 = vperm.xlu0 %1127, %v57
    %v1129 = vpop.permute.xlu0 %1128
    %vm1130 = vcmp.eq.s32.totalorder %v1129, %v69
    %vm1131 = vcmp.eq.s32.totalorder %v1129, %v70
    %vm1132 = vcmp.eq.s32.totalorder %v1129, %v71
    %vm1133 = vcmp.eq.s32.totalorder %v1129, %v72
    %vm1134 = vcmp.eq.s32.totalorder %v1129, %v73
    %vm1135 = vcmp.eq.s32.totalorder %v1129, %v74
    %vm1136 = vcmp.eq.s32.totalorder %v1129, %v75
    %vm1137 = vcmp.eq.s32.totalorder %v1129, %v76
    %v1138 = vsel %vm1130, 1, 0
    %v1139 = vsel %vm1131, 1, 0
    %v1140 = vsel %vm1132, 1, 0
    %v1141 = vsel %vm1133, 1, 0
    %v1142 = vsel %vm1134, 1, 0
    %v1143 = vsel %vm1135, 1, 0
    %v1144 = vsel %vm1136, 1, 0
    %v1145 = vsel %vm1137, 1, 0
    %v1146 = vcvt.s32.f32 %v1138
    %v1147 = vcvt.s32.f32 %v1139
    %v1148 = vcvt.s32.f32 %v1140
    %v1149 = vcvt.s32.f32 %v1141
    %v1150 = vcvt.s32.f32 %v1142
    %v1151 = vcvt.s32.f32 %v1143
    %v1152 = vcvt.s32.f32 %v1144
    %v1153 = vcvt.s32.f32 %v1145
    %v1154 = vadd.f32 %v1119, %v1146
    %v1155 = vadd.f32 %v1120, %v1147
    %v1156 = vadd.f32 %v1121, %v1148
    %v1157 = vadd.f32 %v1122, %v1149
    %v1158 = vadd.f32 %v1123, %v1150
    %v1159 = vadd.f32 %v1124, %v1151
    %v1160 = vadd.f32 %v1125, %v1152
    %v1161 = vadd.f32 %v1126, %v1153
    %1162 = vset.pattern.permute.xlu0 31
    %1163 = vperm.xlu0 %1162, %v57
    %v1164 = vpop.permute.xlu0 %1163
    %vm1165 = vcmp.eq.s32.totalorder %v1164, %v69
    %vm1166 = vcmp.eq.s32.totalorder %v1164, %v70
    %vm1167 = vcmp.eq.s32.totalorder %v1164, %v71
    %vm1168 = vcmp.eq.s32.totalorder %v1164, %v72
    %vm1169 = vcmp.eq.s32.totalorder %v1164, %v73
    %vm1170 = vcmp.eq.s32.totalorder %v1164, %v74
    %vm1171 = vcmp.eq.s32.totalorder %v1164, %v75
    %vm1172 = vcmp.eq.s32.totalorder %v1164, %v76
    %v1173 = vsel %vm1165, 1, 0
    %v1174 = vsel %vm1166, 1, 0
    %v1175 = vsel %vm1167, 1, 0
    %v1176 = vsel %vm1168, 1, 0
    %v1177 = vsel %vm1169, 1, 0
    %v1178 = vsel %vm1170, 1, 0
    %v1179 = vsel %vm1171, 1, 0
    %v1180 = vsel %vm1172, 1, 0
    %v1181 = vcvt.s32.f32 %v1173
    %v1182 = vcvt.s32.f32 %v1174
    %v1183 = vcvt.s32.f32 %v1175
    %v1184 = vcvt.s32.f32 %v1176
    %v1185 = vcvt.s32.f32 %v1177
    %v1186 = vcvt.s32.f32 %v1178
    %v1187 = vcvt.s32.f32 %v1179
    %v1188 = vcvt.s32.f32 %v1180
    %v1189 = vadd.f32 %v1154, %v1181
    %v1190 = vadd.f32 %v1155, %v1182
    %v1191 = vadd.f32 %v1156, %v1183
    %v1192 = vadd.f32 %v1157, %v1184
    %v1193 = vadd.f32 %v1158, %v1185
    %v1194 = vadd.f32 %v1159, %v1186
    %v1195 = vadd.f32 %v1160, %v1187
    %v1196 = vadd.f32 %v1161, %v1188
    %v1197 = vpack.c.bf16 %v1189, %v1189
    %v1198 = vpack.c.bf16 %v1190, %v1190
    %v1199 = vpack.c.bf16 %v1191, %v1191
    %v1200 = vpack.c.bf16 %v1192, %v1192
    %v1201 = vpack.c.bf16 %v1193, %v1193
    %v1202 = vpack.c.bf16 %v1194, %v1194
    %v1203 = vpack.c.bf16 %v1195, %v1195
    %v1204 = vpack.c.bf16 %v1196, %v1196
    %v1205 = vld [vmem:[#allocation2] sm:$0xff]
    %v1206 = vld [vmem:[#allocation4] sm:$0xf]
    %v1207 = vld [vmem:[#allocation4 + $0x4] sm:$0xf]
    %v1208 = vld [vmem:[#allocation4 + $0x8] sm:$0xf]
    %v1209 = vld [vmem:[#allocation4 + $0xc] sm:$0xf]
    %v1210 = vld [vmem:[#allocation4 + $0x10] sm:$0xf]
    %v1211 = vld [vmem:[#allocation4 + $0x14] sm:$0xf]
    %v1212 = vld [vmem:[#allocation4 + $0x18] sm:$0xf]
    %v1213 = vld [vmem:[#allocation4 + $0x1c] sm:$0xf]
    %v1214 = vld [vmem:[#allocation4 + $0x20] sm:$0xf]
    %v1215 = vld [vmem:[#allocation4 + $0x24] sm:$0xf]
    %v1216 = vld [vmem:[#allocation4 + $0x28] sm:$0xf]
    %v1217 = vld [vmem:[#allocation4 + $0x2c] sm:$0xf]
    %v1218 = vld [vmem:[#allocation4 + $0x30] sm:$0xf]
    %v1219 = vld [vmem:[#allocation4 + $0x34] sm:$0xf]
    %v1220 = vld [vmem:[#allocation4 + $0x38] sm:$0xf]
    %v1221 = vld [vmem:[#allocation4 + $0x3c] sm:$0xf]
    %v1222 = vld [vmem:[#allocation4 + $0x40] sm:$0xf]
    %v1223 = vld [vmem:[#allocation4 + $0x44] sm:$0xf]
    %v1224 = vld [vmem:[#allocation4 + $0x48] sm:$0xf]
    %v1225 = vld [vmem:[#allocation4 + $0x4c] sm:$0xf]
    %v1226 = vld [vmem:[#allocation4 + $0x50] sm:$0xf]
    %v1227 = vld [vmem:[#allocation4 + $0x54] sm:$0xf]
    %v1228 = vld [vmem:[#allocation4 + $0x58] sm:$0xf]
    %v1229 = vld [vmem:[#allocation4 + $0x5c] sm:$0xf]
    %v1230 = vld [vmem:[#allocation4 + $0x60] sm:$0xf]
    %v1231 = vld [vmem:[#allocation4 + $0x64] sm:$0xf]
    %v1232 = vld [vmem:[#allocation4 + $0x68] sm:$0xf]
    %v1233 = vld [vmem:[#allocation4 + $0x6c] sm:$0xf]
    %v1234 = vld [vmem:[#allocation4 + $0x70] sm:$0xf]
    %v1235 = vld [vmem:[#allocation4 + $0x74] sm:$0xf]
    %v1236 = vld [vmem:[#allocation4 + $0x78] sm:$0xf]
    %v1237 = vld [vmem:[#allocation4 + $0x7c] sm:$0xf]
    %v1238 = vld [vmem:[#allocation4 + $0x80] sm:$0xf]
    %v1239 = vld [vmem:[#allocation4 + $0x84] sm:$0xf]
    %v1240 = vld [vmem:[#allocation4 + $0x88] sm:$0xf]
    %v1241 = vld [vmem:[#allocation4 + $0x8c] sm:$0xf]
    %v1242 = vld [vmem:[#allocation4 + $0x90] sm:$0xf]
    %v1243 = vld [vmem:[#allocation4 + $0x94] sm:$0xf]
    %v1244 = vld [vmem:[#allocation4 + $0x98] sm:$0xf]
    %v1245 = vld [vmem:[#allocation4 + $0x9c] sm:$0xf]
    %v1246 = vld [vmem:[#allocation4 + $0xa0] sm:$0xf]
    %v1247 = vld [vmem:[#allocation4 + $0xa4] sm:$0xf]
    %v1248 = vld [vmem:[#allocation4 + $0xa8] sm:$0xf]
    %v1249 = vld [vmem:[#allocation4 + $0xac] sm:$0xf]
    %v1250 = vld [vmem:[#allocation4 + $0xb0] sm:$0xf]
    %v1251 = vld [vmem:[#allocation4 + $0xb4] sm:$0xf]
    %v1252 = vld [vmem:[#allocation4 + $0xb8] sm:$0xf]
    %v1253 = vld [vmem:[#allocation4 + $0xbc] sm:$0xf]
    %v1254 = vld [vmem:[#allocation4 + $0xc0] sm:$0xf]
    %v1255 = vld [vmem:[#allocation4 + $0xc4] sm:$0xf]
    %v1256 = vld [vmem:[#allocation4 + $0xc8] sm:$0xf]
    %v1257 = vld [vmem:[#allocation4 + $0xcc] sm:$0xf]
    %v1258 = vld [vmem:[#allocation4 + $0xd0] sm:$0xf]
    %v1259 = vld [vmem:[#allocation4 + $0xd4] sm:$0xf]
    %v1260 = vld [vmem:[#allocation4 + $0xd8] sm:$0xf]
    %v1261 = vld [vmem:[#allocation4 + $0xdc] sm:$0xf]
    %v1262 = vld [vmem:[#allocation4 + $0xe0] sm:$0xf]
    %v1263 = vld [vmem:[#allocation4 + $0xe4] sm:$0xf]
    %v1264 = vld [vmem:[#allocation4 + $0xe8] sm:$0xf]
    %v1265 = vld [vmem:[#allocation4 + $0xec] sm:$0xf]
    %v1266 = vld [vmem:[#allocation4 + $0xf0] sm:$0xf]
    %v1267 = vld [vmem:[#allocation4 + $0xf4] sm:$0xf]
    %v1268 = vld [vmem:[#allocation4 + $0xf8] sm:$0xf]
    %v1269 = vld [vmem:[#allocation4 + $0xfc] sm:$0xf]
    %v1270 = vld [vmem:[#allocation4 + $0x100] sm:$0xf]
    %v1271 = vld [vmem:[#allocation4 + $0x104] sm:$0xf]
    %v1272 = vld [vmem:[#allocation4 + $0x108] sm:$0xf]
    %v1273 = vld [vmem:[#allocation4 + $0x10c] sm:$0xf]
    %v1274 = vld [vmem:[#allocation4 + $0x110] sm:$0xf]
    %v1275 = vld [vmem:[#allocation4 + $0x114] sm:$0xf]
    %v1276 = vld [vmem:[#allocation4 + $0x118] sm:$0xf]
    %v1277 = vld [vmem:[#allocation4 + $0x11c] sm:$0xf]
    %v1278 = vld [vmem:[#allocation4 + $0x120] sm:$0xf]
    %v1279 = vld [vmem:[#allocation4 + $0x124] sm:$0xf]
    %v1280 = vld [vmem:[#allocation4 + $0x128] sm:$0xf]
    %v1281 = vld [vmem:[#allocation4 + $0x12c] sm:$0xf]
    %v1282 = vld [vmem:[#allocation4 + $0x130] sm:$0xf]
    %v1283 = vld [vmem:[#allocation4 + $0x134] sm:$0xf]
    %v1284 = vld [vmem:[#allocation4 + $0x138] sm:$0xf]
    %v1285 = vld [vmem:[#allocation4 + $0x13c] sm:$0xf]
    %v1286 = vld [vmem:[#allocation4 + $0x140] sm:$0xf]
    %v1287 = vld [vmem:[#allocation4 + $0x144] sm:$0xf]
    %v1288 = vld [vmem:[#allocation4 + $0x148] sm:$0xf]
    %v1289 = vld [vmem:[#allocation4 + $0x14c] sm:$0xf]
    %v1290 = vld [vmem:[#allocation4 + $0x150] sm:$0xf]
    %v1291 = vld [vmem:[#allocation4 + $0x154] sm:$0xf]
    %v1292 = vld [vmem:[#allocation4 + $0x158] sm:$0xf]
    %v1293 = vld [vmem:[#allocation4 + $0x15c] sm:$0xf]
    %v1294 = vld [vmem:[#allocation4 + $0x160] sm:$0xf]
    %v1295 = vld [vmem:[#allocation4 + $0x164] sm:$0xf]
    %v1296 = vld [vmem:[#allocation4 + $0x168] sm:$0xf]
    %v1297 = vld [vmem:[#allocation4 + $0x16c] sm:$0xf]
    %v1298 = vld [vmem:[#allocation4 + $0x170] sm:$0xf]
    %v1299 = vld [vmem:[#allocation4 + $0x174] sm:$0xf]
    %v1300 = vld [vmem:[#allocation4 + $0x178] sm:$0xf]
    %v1301 = vld [vmem:[#allocation4 + $0x17c] sm:$0xf]
    %v1302 = vld [vmem:[#allocation4 + $0x180] sm:$0xf]
    %v1303 = vld [vmem:[#allocation4 + $0x184] sm:$0xf]
    %v1304 = vld [vmem:[#allocation4 + $0x188] sm:$0xf]
    %v1305 = vld [vmem:[#allocation4 + $0x18c] sm:$0xf]
    %v1306 = vld [vmem:[#allocation4 + $0x190] sm:$0xf]
    %v1307 = vld [vmem:[#allocation4 + $0x194] sm:$0xf]
    %v1308 = vld [vmem:[#allocation4 + $0x198] sm:$0xf]
    %v1309 = vld [vmem:[#allocation4 + $0x19c] sm:$0xf]
    %v1310 = vld [vmem:[#allocation4 + $0x1a0] sm:$0xf]
    %v1311 = vld [vmem:[#allocation4 + $0x1a4] sm:$0xf]
    %v1312 = vld [vmem:[#allocation4 + $0x1a8] sm:$0xf]
    %v1313 = vld [vmem:[#allocation4 + $0x1ac] sm:$0xf]
    %v1314 = vld [vmem:[#allocation4 + $0x1b0] sm:$0xf]
    %v1315 = vld [vmem:[#allocation4 + $0x1b4] sm:$0xf]
    %v1316 = vld [vmem:[#allocation4 + $0x1b8] sm:$0xf]
    %v1317 = vld [vmem:[#allocation4 + $0x1bc] sm:$0xf]
    %v1318 = vld [vmem:[#allocation4 + $0x1c0] sm:$0xf]
    %v1319 = vld [vmem:[#allocation4 + $0x1c4] sm:$0xf]
    %v1320 = vld [vmem:[#allocation4 + $0x1c8] sm:$0xf]
    %v1321 = vld [vmem:[#allocation4 + $0x1cc] sm:$0xf]
    %v1322 = vld [vmem:[#allocation4 + $0x1d0] sm:$0xf]
    %v1323 = vld [vmem:[#allocation4 + $0x1d4] sm:$0xf]
    %v1324 = vld [vmem:[#allocation4 + $0x1d8] sm:$0xf]
    %v1325 = vld [vmem:[#allocation4 + $0x1dc] sm:$0xf]
    %v1326 = vld [vmem:[#allocation4 + $0x1e0] sm:$0xf]
    %v1327 = vld [vmem:[#allocation4 + $0x1e4] sm:$0xf]
    %v1328 = vld [vmem:[#allocation4 + $0x1e8] sm:$0xf]
    %v1329 = vld [vmem:[#allocation4 + $0x1ec] sm:$0xf]
    %v1330 = vld [vmem:[#allocation4 + $0x1f0] sm:$0xf]
    %v1331 = vld [vmem:[#allocation4 + $0x1f4] sm:$0xf]
    %v1458 = vunpack.c.l.b16 %v1206
    %v1459 = vunpack.c.l.b16 %v1207
    %v1460 = vunpack.c.l.b16 %v1208
    %v1461 = vunpack.c.l.b16 %v1209
    %v1462 = vunpack.c.l.b16 %v1210
    %v1463 = vunpack.c.l.b16 %v1211
    %v1464 = vunpack.c.l.b16 %v1212
    %v1465 = vunpack.c.l.b16 %v1213
    %v1466 = vunpack.c.l.b16 %v1214
    %v1467 = vunpack.c.l.b16 %v1215
    %v1468 = vunpack.c.l.b16 %v1216
    %v1469 = vunpack.c.l.b16 %v1217
    %v1470 = vunpack.c.l.b16 %v1218
    %v1471 = vunpack.c.l.b16 %v1219
    %v1472 = vunpack.c.l.b16 %v1220
    %v1473 = vunpack.c.l.b16 %v1221
    %v1474 = vunpack.c.l.b16 %v1222
    %v1475 = vunpack.c.l.b16 %v1223
    %v1476 = vunpack.c.l.b16 %v1224
    %v1477 = vunpack.c.l.b16 %v1225
    %v1478 = vunpack.c.l.b16 %v1226
    %v1479 = vunpack.c.l.b16 %v1227
    %v1480 = vunpack.c.l.b16 %v1228
    %v1481 = vunpack.c.l.b16 %v1229
    %v1482 = vunpack.c.l.b16 %v1230
    %v1483 = vunpack.c.l.b16 %v1231
    %v1484 = vunpack.c.l.b16 %v1232
    %v1485 = vunpack.c.l.b16 %v1233
    %v1486 = vunpack.c.l.b16 %v1234
    %v1487 = vunpack.c.l.b16 %v1235
    %v1488 = vunpack.c.l.b16 %v1236
    %v1489 = vunpack.c.l.b16 %v1237
    %v1490 = vunpack.c.l.b16 %v1238
    %v1491 = vunpack.c.l.b16 %v1239
    %v1492 = vunpack.c.l.b16 %v1240
    %v1493 = vunpack.c.l.b16 %v1241
    %v1494 = vunpack.c.l.b16 %v1242
    %v1495 = vunpack.c.l.b16 %v1243
    %v1496 = vunpack.c.l.b16 %v1244
    %v1497 = vunpack.c.l.b16 %v1245
    %v1498 = vunpack.c.l.b16 %v1246
    %v1499 = vunpack.c.l.b16 %v1247
    %v1500 = vunpack.c.l.b16 %v1248
    %v1501 = vunpack.c.l.b16 %v1249
    %v1502 = vunpack.c.l.b16 %v1250
    %v1503 = vunpack.c.l.b16 %v1251
    %v1504 = vunpack.c.l.b16 %v1252
    %v1505 = vunpack.c.l.b16 %v1253
    %v1506 = vunpack.c.l.b16 %v1254
    %v1507 = vunpack.c.l.b16 %v1255
    %v1508 = vunpack.c.l.b16 %v1256
    %v1509 = vunpack.c.l.b16 %v1257
    %v1510 = vunpack.c.l.b16 %v1258
    %v1511 = vunpack.c.l.b16 %v1259
    %v1512 = vunpack.c.l.b16 %v1260
    %v1513 = vunpack.c.l.b16 %v1261
    %v1514 = vunpack.c.l.b16 %v1262
    %v1515 = vunpack.c.l.b16 %v1263
    %v1516 = vunpack.c.l.b16 %v1264
    %v1517 = vunpack.c.l.b16 %v1265
    %v1518 = vunpack.c.l.b16 %v1266
    %v1519 = vunpack.c.l.b16 %v1267
    %v1520 = vunpack.c.l.b16 %v1268
    %v1521 = vunpack.c.l.b16 %v1269
    %v1522 = vunpack.c.l.b16 %v1270
    %v1523 = vunpack.c.l.b16 %v1271
    %v1524 = vunpack.c.l.b16 %v1272
    %v1525 = vunpack.c.l.b16 %v1273
    %v1526 = vunpack.c.l.b16 %v1274
    %v1527 = vunpack.c.l.b16 %v1275
    %v1528 = vunpack.c.l.b16 %v1276
    %v1529 = vunpack.c.l.b16 %v1277
    %v1530 = vunpack.c.l.b16 %v1278
    %v1531 = vunpack.c.l.b16 %v1279
    %v1532 = vunpack.c.l.b16 %v1280
    %v1533 = vunpack.c.l.b16 %v1281
    %v1534 = vunpack.c.l.b16 %v1282
    %v1535 = vunpack.c.l.b16 %v1283
    %v1536 = vunpack.c.l.b16 %v1284
    %v1537 = vunpack.c.l.b16 %v1285
    %v1538 = vunpack.c.l.b16 %v1286
    %v1539 = vunpack.c.l.b16 %v1287
    %v1540 = vunpack.c.l.b16 %v1288
    %v1541 = vunpack.c.l.b16 %v1289
    %v1542 = vunpack.c.l.b16 %v1290
    %v1543 = vunpack.c.l.b16 %v1291
    %v1544 = vunpack.c.l.b16 %v1292
    %v1545 = vunpack.c.l.b16 %v1293
    %v1546 = vunpack.c.l.b16 %v1294
    %v1547 = vunpack.c.l.b16 %v1295
    %v1548 = vunpack.c.l.b16 %v1296
    %v1549 = vunpack.c.l.b16 %v1297
    %v1550 = vunpack.c.l.b16 %v1298
    %v1551 = vunpack.c.l.b16 %v1299
    %v1552 = vunpack.c.l.b16 %v1300
    %v1553 = vunpack.c.l.b16 %v1301
    %v1554 = vunpack.c.l.b16 %v1302
    %v1555 = vunpack.c.l.b16 %v1303
    %v1556 = vunpack.c.l.b16 %v1304
    %v1557 = vunpack.c.l.b16 %v1305
    %v1558 = vunpack.c.l.b16 %v1306
    %v1559 = vunpack.c.l.b16 %v1307
    %v1560 = vunpack.c.l.b16 %v1308
    %v1561 = vunpack.c.l.b16 %v1309
    %v1562 = vunpack.c.l.b16 %v1310
    %v1563 = vunpack.c.l.b16 %v1311
    %v1564 = vunpack.c.l.b16 %v1312
    %v1565 = vunpack.c.l.b16 %v1313
    %v1566 = vunpack.c.l.b16 %v1314
    %v1567 = vunpack.c.l.b16 %v1315
    %v1568 = vunpack.c.l.b16 %v1316
    %v1569 = vunpack.c.l.b16 %v1317
    %v1570 = vunpack.c.l.b16 %v1318
    %v1571 = vunpack.c.l.b16 %v1319
    %v1572 = vunpack.c.l.b16 %v1320
    %v1573 = vunpack.c.l.b16 %v1321
    %v1574 = vunpack.c.l.b16 %v1322
    %v1575 = vunpack.c.l.b16 %v1323
    %v1576 = vunpack.c.l.b16 %v1324
    %v1577 = vunpack.c.l.b16 %v1325
    %v1578 = vunpack.c.l.b16 %v1326
    %v1579 = vunpack.c.l.b16 %v1327
    %v1580 = vunpack.c.l.b16 %v1328
    %v1581 = vunpack.c.l.b16 %v1329
    %v1582 = vunpack.c.l.b16 %v1330
    %v1583 = vunpack.c.l.b16 %v1331
    %v1584 = vpack.c.b16 %v1459, %v1458
    %v1585 = vpack.c.b16 %v1461, %v1460
    %v1586 = vpack.c.b16 %v1463, %v1462
    %v1587 = vpack.c.b16 %v1465, %v1464
    %v1588 = vpack.c.b16 %v1467, %v1466
    %v1589 = vpack.c.b16 %v1469, %v1468
    %v1590 = vpack.c.b16 %v1471, %v1470
    %v1591 = vpack.c.b16 %v1473, %v1472
    %v1592 = vpack.c.b16 %v1475, %v1474
    %v1593 = vpack.c.b16 %v1477, %v1476
    %v1594 = vpack.c.b16 %v1479, %v1478
    %v1595 = vpack.c.b16 %v1481, %v1480
    %v1596 = vpack.c.b16 %v1483, %v1482
    %v1597 = vpack.c.b16 %v1485, %v1484
    %v1598 = vpack.c.b16 %v1487, %v1486
    %v1599 = vpack.c.b16 %v1489, %v1488
    %v1600 = vpack.c.b16 %v1491, %v1490
    %v1601 = vpack.c.b16 %v1493, %v1492
    %v1602 = vpack.c.b16 %v1495, %v1494
    %v1603 = vpack.c.b16 %v1497, %v1496
    %v1604 = vpack.c.b16 %v1499, %v1498
    %v1605 = vpack.c.b16 %v1501, %v1500
    %v1606 = vpack.c.b16 %v1503, %v1502
    %v1607 = vpack.c.b16 %v1505, %v1504
    %v1608 = vpack.c.b16 %v1507, %v1506
    %v1609 = vpack.c.b16 %v1509, %v1508
    %v1610 = vpack.c.b16 %v1511, %v1510
    %v1611 = vpack.c.b16 %v1513, %v1512
    %v1612 = vpack.c.b16 %v1515, %v1514
    %v1613 = vpack.c.b16 %v1517, %v1516
    %v1614 = vpack.c.b16 %v1519, %v1518
    %v1615 = vpack.c.b16 %v1521, %v1520
    %v1616 = vpack.c.b16 %v1523, %v1522
    %v1617 = vpack.c.b16 %v1525, %v1524
    %v1618 = vpack.c.b16 %v1527, %v1526
    %v1619 = vpack.c.b16 %v1529, %v1528
    %v1620 = vpack.c.b16 %v1531, %v1530
    %v1621 = vpack.c.b16 %v1533, %v1532
    %v1622 = vpack.c.b16 %v1535, %v1534
    %v1623 = vpack.c.b16 %v1537, %v1536
    %v1624 = vpack.c.b16 %v1539, %v1538
    %v1625 = vpack.c.b16 %v1541, %v1540
    %v1626 = vpack.c.b16 %v1543, %v1542
    %v1627 = vpack.c.b16 %v1545, %v1544
    %v1628 = vpack.c.b16 %v1547, %v1546
    %v1629 = vpack.c.b16 %v1549, %v1548
    %v1630 = vpack.c.b16 %v1551, %v1550
    %v1631 = vpack.c.b16 %v1553, %v1552
    %v1632 = vpack.c.b16 %v1555, %v1554
    %v1633 = vpack.c.b16 %v1557, %v1556
    %v1634 = vpack.c.b16 %v1559, %v1558
    %v1635 = vpack.c.b16 %v1561, %v1560
    %v1636 = vpack.c.b16 %v1563, %v1562
    %v1637 = vpack.c.b16 %v1565, %v1564
    %v1638 = vpack.c.b16 %v1567, %v1566
    %v1639 = vpack.c.b16 %v1569, %v1568
    %v1640 = vpack.c.b16 %v1571, %v1570
    %v1641 = vpack.c.b16 %v1573, %v1572
    %v1642 = vpack.c.b16 %v1575, %v1574
    %v1643 = vpack.c.b16 %v1577, %v1576
    %v1644 = vpack.c.b16 %v1579, %v1578
    %v1645 = vpack.c.b16 %v1581, %v1580
    %v1646 = vpack.c.b16 %v1583, %v1582
    %vm1710 = vcmask 916480
    %v1712 = vsel %vm1710, %v1204, 0
    %1714 = vmatprep.subr.bf16.mxu0 0
    %1715 = vmatpush1.bf16.msra.mxu0 %v1591
    %1716 = vmatprep.subr.bf16.mxu0 0
    %1717 = vmatpush1.bf16.msra.mxu0 %v1590
    %1718 = vmatprep.subr.bf16.mxu0 0
    %1719 = vmatpush1.bf16.msra.mxu0 %v1589
    %1720 = vmatprep.subr.bf16.mxu0 0
    %1721 = vmatpush1.bf16.msra.mxu0 %v1588
    %1722 = vmatprep.subr.bf16.mxu0 0
    %1723 = vmatpush1.bf16.msra.mxu0 %v1587
    %1724 = vmatprep.subr.bf16.mxu0 0
    %1725 = vmatpush1.bf16.msra.mxu0 %v1586
    %1726 = vmatprep.subr.bf16.mxu0 0
    %1727 = vmatpush1.bf16.msra.mxu0 %v1585
    %1728 = vmatprep.subr.bf16.mxu0 0
    %1729 = vmatpush1.bf16.msra.mxu0 %v1584
    %1730 = vmatprep.subr.bf16.mxu0 0
    %1731 = vmatpush2.bf16.msra.mxu0 %v1599
    %1732 = vmatprep.subr.bf16.mxu0 0
    %1733 = vmatpush2.bf16.msra.mxu0 %v1598
    %1734 = vmatprep.subr.bf16.mxu0 0
    %1735 = vmatpush2.bf16.msra.mxu0 %v1597
    %1736 = vmatprep.subr.bf16.mxu0 0
    %1737 = vmatpush2.bf16.msra.mxu0 %v1596
    %1738 = vmatprep.subr.bf16.mxu0 0
    %1739 = vmatpush2.bf16.msra.mxu0 %v1595
    %1740 = vmatprep.subr.bf16.mxu0 0
    %1741 = vmatpush2.bf16.msra.mxu0 %v1594
    %1742 = vmatprep.subr.bf16.mxu0 0
    %1743 = vmatpush2.bf16.msra.mxu0 %v1593
    %1744 = vmatprep.subr.bf16.mxu0 0
    %1745 = vmatpush2.bf16.msra.mxu0 %v1592
    %1746 = vmatprep.mubr.bf16.mxu0 %v1198
    %1747 = vmatmul.mubr.bf16.gmra.mxu0 %v1197
    %v1748 = vpop.f32.mrf.mxu0
    %v1749 = vadd.f32 0.0, %v1748
    %v1750 = vpop.f32.mrf.mxu0
    %v1751 = vpop.f32.mrf.mxu0
    %v1752 = vpop.f32.mrf.mxu0
    %1753 = vdwg.mxu0
    %1754 = vmatprep.subr.bf16.mxu0 0
    %1755 = vmatpush1.bf16.msra.mxu0 %v1607
    %1756 = vmatprep.subr.bf16.mxu0 0
    %1757 = vmatpush1.bf16.msra.mxu0 %v1606
    %1758 = vmatprep.subr.bf16.mxu0 0
    %1759 = vmatpush1.bf16.msra.mxu0 %v1605
    %1760 = vmatprep.subr.bf16.mxu0 0
    %1761 = vmatpush1.bf16.msra.mxu0 %v1604
    %1762 = vmatprep.subr.bf16.mxu0 0
    %1763 = vmatpush1.bf16.msra.mxu0 %v1603
    %1764 = vmatprep.subr.bf16.mxu0 0
    %1765 = vmatpush1.bf16.msra.mxu0 %v1602
    %1766 = vmatprep.subr.bf16.mxu0 0
    %1767 = vmatpush1.bf16.msra.mxu0 %v1601
    %1768 = vmatprep.subr.bf16.mxu0 0
    %1769 = vmatpush1.bf16.msra.mxu0 %v1600
    %1770 = vmatprep.subr.bf16.mxu0 0
    %1771 = vmatpush2.bf16.msra.mxu0 %v1615
    %1772 = vmatprep.subr.bf16.mxu0 0
    %1773 = vmatpush2.bf16.msra.mxu0 %v1614
    %1774 = vmatprep.subr.bf16.mxu0 0
    %1775 = vmatpush2.bf16.msra.mxu0 %v1613
    %1776 = vmatprep.subr.bf16.mxu0 0
    %1777 = vmatpush2.bf16.msra.mxu0 %v1612
    %1778 = vmatprep.subr.bf16.mxu0 0
    %1779 = vmatpush2.bf16.msra.mxu0 %v1611
    %1780 = vmatprep.subr.bf16.mxu0 0
    %1781 = vmatpush2.bf16.msra.mxu0 %v1610
    %1782 = vmatprep.subr.bf16.mxu0 0
    %1783 = vmatpush2.bf16.msra.mxu0 %v1609
    %1784 = vmatprep.subr.bf16.mxu0 0
    %1785 = vmatpush2.bf16.msra.mxu0 %v1608
    %1786 = vmatprep.mubr.bf16.mxu0 %v1200
    %1787 = vmatmul.mubr.bf16.gmra.mxu0 %v1199
    %v1788 = vpop.f32.mrf.mxu0
    %v1789 = vadd.f32 %v1749, %v1788
    %v1790 = vpop.f32.mrf.mxu0
    %v1791 = vpop.f32.mrf.mxu0
    %v1792 = vpop.f32.mrf.mxu0
    %1793 = vdwg.mxu0
    %1794 = vmatprep.subr.bf16.mxu0 0
    %1795 = vmatpush1.bf16.msra.mxu0 %v1623
    %1796 = vmatprep.subr.bf16.mxu0 0
    %1797 = vmatpush1.bf16.msra.mxu0 %v1622
    %1798 = vmatprep.subr.bf16.mxu0 0
    %1799 = vmatpush1.bf16.msra.mxu0 %v1621
    %1800 = vmatprep.subr.bf16.mxu0 0
    %1801 = vmatpush1.bf16.msra.mxu0 %v1620
    %1802 = vmatprep.subr.bf16.mxu0 0
    %1803 = vmatpush1.bf16.msra.mxu0 %v1619
    %1804 = vmatprep.subr.bf16.mxu0 0
    %1805 = vmatpush1.bf16.msra.mxu0 %v1618
    %1806 = vmatprep.subr.bf16.mxu0 0
    %1807 = vmatpush1.bf16.msra.mxu0 %v1617
    %1808 = vmatprep.subr.bf16.mxu0 0
    %1809 = vmatpush1.bf16.msra.mxu0 %v1616
    %1810 = vmatprep.subr.bf16.mxu0 0
    %1811 = vmatpush2.bf16.msra.mxu0 %v1631
    %1812 = vmatprep.subr.bf16.mxu0 0
    %1813 = vmatpush2.bf16.msra.mxu0 %v1630
    %1814 = vmatprep.subr.bf16.mxu0 0
    %1815 = vmatpush2.bf16.msra.mxu0 %v1629
    %1816 = vmatprep.subr.bf16.mxu0 0
    %1817 = vmatpush2.bf16.msra.mxu0 %v1628
    %1818 = vmatprep.subr.bf16.mxu0 0
    %1819 = vmatpush2.bf16.msra.mxu0 %v1627
    %1820 = vmatprep.subr.bf16.mxu0 0
    %1821 = vmatpush2.bf16.msra.mxu0 %v1626
    %1822 = vmatprep.subr.bf16.mxu0 0
    %1823 = vmatpush2.bf16.msra.mxu0 %v1625
    %1824 = vmatprep.subr.bf16.mxu0 0
    %1825 = vmatpush2.bf16.msra.mxu0 %v1624
    %1826 = vmatprep.mubr.bf16.mxu0 %v1202
    %1827 = vmatmul.mubr.bf16.gmra.mxu0 %v1201
    %v1828 = vpop.f32.mrf.mxu0
    %v1829 = vadd.f32 %v1789, %v1828
    %v1830 = vpop.f32.mrf.mxu0
    %v1831 = vpop.f32.mrf.mxu0
    %v1832 = vpop.f32.mrf.mxu0
    %1833 = vdwg.mxu0
    %1834 = vmatprep.subr.bf16.mxu0 0
    %1835 = vmatpush1.bf16.msra.mxu0 %v1639
    %1836 = vmatprep.subr.bf16.mxu0 0
    %1837 = vmatpush1.bf16.msra.mxu0 %v1638
    %1838 = vmatprep.subr.bf16.mxu0 0
    %1839 = vmatpush1.bf16.msra.mxu0 %v1637
    %1840 = vmatprep.subr.bf16.mxu0 0
    %1841 = vmatpush1.bf16.msra.mxu0 %v1636
    %1842 = vmatprep.subr.bf16.mxu0 0
    %1843 = vmatpush1.bf16.msra.mxu0 %v1635
    %1844 = vmatprep.subr.bf16.mxu0 0
    %1845 = vmatpush1.bf16.msra.mxu0 %v1634
    %1846 = vmatprep.subr.bf16.mxu0 0
    %1847 = vmatpush1.bf16.msra.mxu0 %v1633
    %1848 = vmatprep.subr.bf16.mxu0 0
    %1849 = vmatpush1.bf16.msra.mxu0 %v1632
    %1850 = vmatprep.subr.bf16.mxu0 0
    %1851 = vmatpush2.bf16.msra.mxu0 0
    %1852 = vmatprep.subr.bf16.mxu0 0
    %1853 = vmatpush2.bf16.msra.mxu0 %v1646
    %1854 = vmatprep.subr.bf16.mxu0 0
    %1855 = vmatpush2.bf16.msra.mxu0 %v1645
    %1856 = vmatprep.subr.bf16.mxu0 0
    %1857 = vmatpush2.bf16.msra.mxu0 %v1644
    %1858 = vmatprep.subr.bf16.mxu0 0
    %1859 = vmatpush2.bf16.msra.mxu0 %v1643
    %1860 = vmatprep.subr.bf16.mxu0 0
    %1861 = vmatpush2.bf16.msra.mxu0 %v1642
    %1862 = vmatprep.subr.bf16.mxu0 0
    %1863 = vmatpush2.bf16.msra.mxu0 %v1641
    %1864 = vmatprep.subr.bf16.mxu0 0
    %1865 = vmatpush2.bf16.msra.mxu0 %v1640
    %1866 = vmatprep.mubr.bf16.mxu0 %v1712
    %1867 = vmatmul.mubr.bf16.gmra.mxu0 %v1203
    %v1868 = vpop.f32.mrf.mxu0
    %v1869 = vadd.f32 %v1829, %v1868
    %v1870 = vpop.f32.mrf.mxu0
    %v1871 = vpop.f32.mrf.mxu0
    %v1872 = vpop.f32.mrf.mxu0
    %1873 = vdwg.mxu0
    %v1874 = vadd.f32 %v1205, %v1869
    %1875 = vst [vmem:[#allocation2] sm:$0xff] %v1874
    // Predicated region
    $region46: #{tpu_custom_call.1} parent=1 // pred_check
      %p1876 = pneg %p52
    $region47: #{tpu_custom_call.1} parent=1 // pred_check_branch
      %1878 = sbr.rel (%p1876) target = $region49
    $region48: #{tpu_custom_call.1} parent=1 // pred_region
      %v1879 = vld [vmem:[#allocation2] sm:$0xff]
      %v1880 = vmul.f32 %v1879, 0.03125
      %v1881 = vld [vmem:[%s2] sm:$0xf]
      %v1882 = vld [vmem:[%s2 + $0x4] sm:$0xf]
      %v1883 = vld [vmem:[%s2 + $0x8] sm:$0xf]
      %v1884 = vld [vmem:[%s2 + $0xc] sm:$0xf]
      %v1885 = vld [vmem:[%s2 + $0x10] sm:$0xf]
      %v1886 = vld [vmem:[%s2 + $0x14] sm:$0xf]
      %v1887 = vld [vmem:[%s2 + $0x18] sm:$0xf]
      %v1888 = vld [vmem:[%s2 + $0x1c] sm:$0xf]
      %v1889 = vld [vmem:[%s2 + $0x20] sm:$0xf]
      %v1890 = vld [vmem:[%s2 + $0x24] sm:$0xf]
      %v1891 = vld [vmem:[%s2 + $0x28] sm:$0xf]
      %v1892 = vld [vmem:[%s2 + $0x2c] sm:$0xf]
      %v1893 = vld [vmem:[%s2 + $0x30] sm:$0xf]
      %v1894 = vld [vmem:[%s2 + $0x34] sm:$0xf]
      %v1895 = vld [vmem:[%s2 + $0x38] sm:$0xf]
      %v1896 = vld [vmem:[%s2 + $0x3c] sm:$0xf]
      %v1897 = vld [vmem:[%s3] sm:$0x1]
      %v1898 = vld [vmem:[%s4] sm:$0x1]
      %v1899 = vld [vmem:[%s5] sm:$0x1]
      %v1900 = vld [vmem:[%s6] sm:$0xf]
      %v1901 = vld [vmem:[%s6 + $0x4] sm:$0xf]
      %v1902 = vld [vmem:[%s6 + $0x8] sm:$0xf]
      %v1903 = vld [vmem:[%s6 + $0xc] sm:$0xf]
      %v1904 = vld [vmem:[%s6 + $0x10] sm:$0xf]
      %v1905 = vld [vmem:[%s6 + $0x14] sm:$0xf]
      %v1906 = vld [vmem:[%s6 + $0x18] sm:$0xf]
      %v1907 = vld [vmem:[%s6 + $0x1c] sm:$0xf]
      %v1908 = vld [vmem:[%s6 + $0x20] sm:$0xf]
      %v1909 = vld [vmem:[%s6 + $0x24] sm:$0xf]
      %v1910 = vld [vmem:[%s6 + $0x28] sm:$0xf]
      %v1911 = vld [vmem:[%s6 + $0x2c] sm:$0xf]
      %v1912 = vld [vmem:[%s6 + $0x30] sm:$0xf]
      %v1913 = vld [vmem:[%s6 + $0x34] sm:$0xf]
      %v1914 = vld [vmem:[%s6 + $0x38] sm:$0xf]
      %v1915 = vld [vmem:[%s6 + $0x3c] sm:$0xf]
      %v1916 = vld [vmem:[#allocation3] sm:$0x1]
      %v1917 = vld [vmem:[%s8] sm:$0xff]
      %v1918 = vunpack.c.l.bf16 %v1881
      %v1919 = vunpack.c.l.bf16 %v1882
      %v1920 = vunpack.c.l.bf16 %v1883
      %v1921 = vunpack.c.l.bf16 %v1884
      %v1922 = vunpack.c.l.bf16 %v1885
      %v1923 = vunpack.c.l.bf16 %v1886
      %v1924 = vunpack.c.l.bf16 %v1887
      %v1925 = vunpack.c.l.bf16 %v1888
      %v1926 = vunpack.c.l.bf16 %v1889
      %v1927 = vunpack.c.l.bf16 %v1890
      %v1928 = vunpack.c.l.bf16 %v1891
      %v1929 = vunpack.c.l.bf16 %v1892
      %v1930 = vunpack.c.l.bf16 %v1893
      %v1931 = vunpack.c.l.bf16 %v1894
      %v1932 = vunpack.c.l.bf16 %v1895
      %v1933 = vunpack.c.l.bf16 %v1896
      %v1935 = vlaneseq
      %v1936 = vshrl.u32 %v1935, 7
      %v1937 = vsub.s32 0, %v1936
      %v1938 = vrot.slane %v1897, %v1937
      %1940 = vmatprep.subr.mxu0 0.0
      %1941 = vmatpush1.msra.mxu0 %v1933
      %1942 = vmatprep.subr.mxu0 0.0
      %1943 = vmatpush1.msra.mxu0 %v1932
      %1944 = vmatprep.subr.mxu0 0.0
      %1945 = vmatpush1.msra.mxu0 %v1931
      %1946 = vmatprep.subr.mxu0 0.0
      %1947 = vmatpush1.msra.mxu0 %v1930
      %1948 = vmatprep.subr.mxu0 0.0
      %1949 = vmatpush1.msra.mxu0 %v1929
      %1950 = vmatprep.subr.mxu0 0.0
      %1951 = vmatpush1.msra.mxu0 %v1928
      %1952 = vmatprep.subr.mxu0 0.0
      %1953 = vmatpush1.msra.mxu0 %v1927
      %1954 = vmatprep.subr.mxu0 0.0
      %1955 = vmatpush1.msra.mxu0 %v1926
      %1956 = vmatprep.subr.mxu0 0.0
      %1957 = vmatpush1.msra.mxu0 %v1925
      %1958 = vmatprep.subr.mxu0 0.0
      %1959 = vmatpush1.msra.mxu0 %v1924
      %1960 = vmatprep.subr.mxu0 0.0
      %1961 = vmatpush1.msra.mxu0 %v1923
      %1962 = vmatprep.subr.mxu0 0.0
      %1963 = vmatpush1.msra.mxu0 %v1922
      %1964 = vmatprep.subr.mxu0 0.0
      %1965 = vmatpush1.msra.mxu0 %v1921
      %1966 = vmatprep.subr.mxu0 0.0
      %1967 = vmatpush1.msra.mxu0 %v1920
      %1968 = vmatprep.subr.mxu0 0.0
      %1969 = vmatpush1.msra.mxu0 %v1919
      %1970 = vmatprep.subr.mxu0 0.0
      %1971 = vmatpush1.msra.mxu0 %v1918
      %1972 = vmatprep.subr.mxu0 0.0
      %1973 = vmatpush2.msra.mxu0 0.0
      %1974 = vmatprep.subr.mxu0 0.0
      %1975 = vmatpush2.msra.mxu0 0.0
      %1976 = vmatprep.subr.mxu0 0.0
      %1977 = vmatpush2.msra.mxu0 0.0
      %1978 = vmatprep.subr.mxu0 0.0
      %1979 = vmatpush2.msra.mxu0 0.0
      %1980 = vmatprep.subr.mxu0 0.0
      %1981 = vmatpush2.msra.mxu0 0.0
      %1982 = vmatprep.subr.mxu0 0.0
      %1983 = vmatpush2.msra.mxu0 0.0
      %1984 = vmatprep.subr.mxu0 0.0
      %1985 = vmatpush2.msra.mxu0 0.0
      %1986 = vmatprep.subr.mxu0 0.0
      %1987 = vmatpush2.msra.mxu0 0.0
      %1988 = vmatprep.subr.mxu0 0.0
      %1989 = vmatpush2.msra.mxu0 0.0
      %1990 = vmatprep.subr.mxu0 0.0
      %1991 = vmatpush2.msra.mxu0 0.0
      %1992 = vmatprep.subr.mxu0 0.0
      %1993 = vmatpush2.msra.mxu0 0.0
      %1994 = vmatprep.subr.mxu0 0.0
      %1995 = vmatpush2.msra.mxu0 0.0
      %1996 = vmatprep.subr.mxu0 0.0
      %1997 = vmatpush2.msra.mxu0 0.0
      %1998 = vmatprep.subr.mxu0 0.0
      %1999 = vmatpush2.msra.mxu0 0.0
      %2000 = vmatprep.subr.mxu0 0.0
      %2001 = vmatpush2.msra.mxu0 0.0
      %2002 = vmatprep.subr.mxu0 0.0
      %2003 = vmatpush2.msra.mxu0 0.0
      %2004 = vmatprep.mubr.f32.mxu0 0.0
      %2005 = vmatmul.mubr.f32.gmra.mxu0 %v1880
      %v2006 = vpop.f32.mrf.mxu0
      %v2007 = vadd.f32 %v1938, %v2006
      %v2008 = vpop.f32.mrf.mxu0
      %2009 = vdwg.mxu0
      %v2010 = vrot.slane %v2007, 4
      %v2011 = vadd.f32 %v2007, %v2010
      %v2012 = vrot.slane %v2011, 2
      %v2013 = vadd.f32 %v2011, %v2012
      %v2014 = vrot.slane %v2013, 1
      %v2015 = vadd.f32 %v2013, %v2014
      %v2016 = vrcp.pop 8.0
      %v2017 = vmul.f32 %v2015, %v2016
      %v2018 = vsub.f32 %v2007, %v2017
      %v2019 = vmul.f32 %v2018, %v2018
      %v2020 = vrot.slane %v2019, 4
      %v2021 = vadd.f32 %v2019, %v2020
      %v2022 = vrot.slane %v2021, 2
      %v2023 = vadd.f32 %v2021, %v2022
      %v2024 = vrot.slane %v2023, 1
      %v2025 = vadd.f32 %v2023, %v2024
      %v2026 = vmul.f32 %v2025, %v2016
      %v2027 = vadd.f32 %v2026, 1e-05
      %v2028 = vrsqrt.pop %v2027
      %v2029 = vmul.f32 %v2018, %v2028
      %v2031 = vlaneseq
      %v2032 = vshrl.u32 %v2031, 7
      %v2033 = vsub.s32 0, %v2032
      %v2034 = vrot.slane %v1898, %v2033
      %v2036 = vmul.f32 %v2029, %v2034
      %v2038 = vlaneseq
      %v2039 = vshrl.u32 %v2038, 7
      %v2040 = vsub.s32 0, %v2039
      %v2041 = vrot.slane %v1899, %v2040
      %v2043 = vadd.f32 %v2036, %v2041
      %v2044 = vmax.f32 %v2043, 0.0
      %v2045 = vunpack.c.l.bf16 %v1900
      %v2046 = vunpack.c.l.bf16 %v1901
      %v2047 = vunpack.c.l.bf16 %v1902
      %v2048 = vunpack.c.l.bf16 %v1903
      %v2049 = vunpack.c.l.bf16 %v1904
      %v2050 = vunpack.c.l.bf16 %v1905
      %v2051 = vunpack.c.l.bf16 %v1906
      %v2052 = vunpack.c.l.bf16 %v1907
      %v2053 = vunpack.c.l.bf16 %v1908
      %v2054 = vunpack.c.l.bf16 %v1909
      %v2055 = vunpack.c.l.bf16 %v1910
      %v2056 = vunpack.c.l.bf16 %v1911
      %v2057 = vunpack.c.l.bf16 %v1912
      %v2058 = vunpack.c.l.bf16 %v1913
      %v2059 = vunpack.c.l.bf16 %v1914
      %v2060 = vunpack.c.l.bf16 %v1915
      %v2062 = vlaneseq
      %v2063 = vshrl.u32 %v2062, 7
      %v2064 = vsub.s32 0, %v2063
      %v2065 = vrot.slane %v1916, %v2064
      %2067 = vmatprep.subr.mxu0 0.0
      %2068 = vmatpush1.msra.mxu0 %v2060
      %2069 = vmatprep.subr.mxu0 0.0
      %2070 = vmatpush1.msra.mxu0 %v2059
      %2071 = vmatprep.subr.mxu0 0.0
      %2072 = vmatpush1.msra.mxu0 %v2058
      %2073 = vmatprep.subr.mxu0 0.0
      %2074 = vmatpush1.msra.mxu0 %v2057
      %2075 = vmatprep.subr.mxu0 0.0
      %2076 = vmatpush1.msra.mxu0 %v2056
      %2077 = vmatprep.subr.mxu0 0.0
      %2078 = vmatpush1.msra.mxu0 %v2055
      %2079 = vmatprep.subr.mxu0 0.0
      %2080 = vmatpush1.msra.mxu0 %v2054
      %2081 = vmatprep.subr.mxu0 0.0
      %2082 = vmatpush1.msra.mxu0 %v2053
      %2083 = vmatprep.subr.mxu0 0.0
      %2084 = vmatpush1.msra.mxu0 %v2052
      %2085 = vmatprep.subr.mxu0 0.0
      %2086 = vmatpush1.msra.mxu0 %v2051
      %2087 = vmatprep.subr.mxu0 0.0
      %2088 = vmatpush1.msra.mxu0 %v2050
      %2089 = vmatprep.subr.mxu0 0.0
      %2090 = vmatpush1.msra.mxu0 %v2049
      %2091 = vmatprep.subr.mxu0 0.0
      %2092 = vmatpush1.msra.mxu0 %v2048
      %2093 = vmatprep.subr.mxu0 0.0
      %2094 = vmatpush1.msra.mxu0 %v2047
      %2095 = vmatprep.subr.mxu0 0.0
      %2096 = vmatpush1.msra.mxu0 %v2046
      %2097 = vmatprep.subr.mxu0 0.0
      %2098 = vmatpush1.msra.mxu0 %v2045
      %2099 = vmatprep.subr.mxu0 0.0
      %2100 = vmatpush2.msra.mxu0 0.0
      %2101 = vmatprep.subr.mxu0 0.0
      %2102 = vmatpush2.msra.mxu0 0.0
      %2103 = vmatprep.subr.mxu0 0.0
      %2104 = vmatpush2.msra.mxu0 0.0
      %2105 = vmatprep.subr.mxu0 0.0
      %2106 = vmatpush2.msra.mxu0 0.0
      %2107 = vmatprep.subr.mxu0 0.0
      %2108 = vmatpush2.msra.mxu0 0.0
      %2109 = vmatprep.subr.mxu0 0.0
      %2110 = vmatpush2.msra.mxu0 0.0
      %2111 = vmatprep.subr.mxu0 0.0
      %2112 = vmatpush2.msra.mxu0 0.0
      %2113 = vmatprep.subr.mxu0 0.0
      %2114 = vmatpush2.msra.mxu0 0.0
      %2115 = vmatprep.subr.mxu0 0.0
      %2116 = vmatpush2.msra.mxu0 0.0
      %2117 = vmatprep.subr.mxu0 0.0
      %2118 = vmatpush2.msra.mxu0 0.0
      %2119 = vmatprep.subr.mxu0 0.0
      %2120 = vmatpush2.msra.mxu0 0.0
      %2121 = vmatprep.subr.mxu0 0.0
      %2122 = vmatpush2.msra.mxu0 0.0
      %2123 = vmatprep.subr.mxu0 0.0
      %2124 = vmatpush2.msra.mxu0 0.0
      %2125 = vmatprep.subr.mxu0 0.0
      %2126 = vmatpush2.msra.mxu0 0.0
      %2127 = vmatprep.subr.mxu0 0.0
      %2128 = vmatpush2.msra.mxu0 0.0
      %2129 = vmatprep.subr.mxu0 0.0
      %2130 = vmatpush2.msra.mxu0 0.0
      %2131 = vmatprep.mubr.f32.mxu0 0.0
      %2132 = vmatmul.mubr.f32.gmra.mxu0 %v2044
      %v2133 = vpop.f32.mrf.mxu0
      %v2134 = vadd.f32 %v2065, %v2133
      %v2135 = vpop.f32.mrf.mxu0
      %2136 = vdwg.mxu0
      %v2137 = vmax.f32 %v2134, 0.0
      %v2138 = vmul.f32 %v2134, %v1917
      %v2139 = vsub.f32 %v2137, %v2138
      %v2140 = vand.u32 2147483647, %v2134
      %v2141 = vsub.f32 0.0, %v2140
      %v2142 = vmul.f32 %v2141, 1.442695
      %v2143 = vpow.pop %v2142
      %v2144 = vadd.f32 %v2143, 1.0
      %v2145 = vlog2.pop %v2144
      %v2146 = vmul.f32 %v2145, 0.6931472
      %v2147 = vmul.f32 -0.5, %v2143
      %v2148 = vadd.f32 %v2147, 1.0
      %v2149 = vmul.f32 %v2148, %v2143
      %v2150 = vand.u32 2147483647, %v2143
      %vm2151 = vcmp.lt.f32.partialorder %v2150, 0.0004427343
      %v2152 = vsel %vm2151, %v2149, %v2146
      %v2153 = vadd.f32 %v2139, %v2152
      %vm2154 = vcmask 7168
      %v2155 = vsel %vm2154, %v2153, 0.0
      %2156 = vadd.xlane.f32.xlu0 %v2155
      %v2157 = vpop.xlane.xlu0 %2156
      %v2158 = vrot.slane %v2157, 4
      %v2159 = vadd.f32 %v2157, %v2158
      %v2160 = vrot.slane %v2159, 2
      %v2161 = vadd.f32 %v2159, %v2160
      %v2162 = vrot.slane %v2161, 1
      %v2163 = vadd.f32 %v2161, %v2162
      %s2164 = vtos %v2163
      %v2165 = vrcp.pop 8.0
      %s2166 = vtos %v2165
      %s2167 = smul.f32 %s2164, %s2166
      %v2168 = vstv %s2167
      %2169 = vst.msk [vmem:[%s9] sm:$0xff] %vm2154, %v2134
      %vm2170 = vcmask 0
      %2171 = vst.msk [vmem:[#allocation7] sm:$0x1] %vm2170, %v2168
    $region49: #{tpu_custom_call.1} parent=1 // pred_fallthru
      _
    // Predicated region
    $region50: #{tpu_custom_call.1} parent=1 // pred_check
      _
    $region51: #{tpu_custom_call.1} parent=1 // pred_check_branch
      %2173 = sbr.rel (0) target = $region53
    $region52: #{tpu_custom_call.1} parent=1 // pred_region
      _
    $region53: #{tpu_custom_call.1} parent=1 // pred_fallthru
      _
    // Predicated region
    $region54: #{tpu_custom_call.1} parent=1 // pred_check
      _
    $region55: #{tpu_custom_call.1} parent=1 // pred_check_branch
      %2175 = sbr.rel (0) target = $region57
    $region56: #{tpu_custom_call.1} parent=1 // pred_region
      %s2177 = ssub.s32 16, 16
      %2178 = vsyncadd [#allocation6], %s2177
      %s2180 = sshll.u32 [#allocation7], 4
      %s2181 = int_to_ptr.vmem [resolvable:$true] %s2180
      %2183 = dma.vmem_to_hbm [thread:$0]  %s2181, 16, %s10, [#allocation6]
    $region57: #{tpu_custom_call.1} parent=1 // pred_fallthru
      _
    // Predicated region
    $region58: #{tpu_custom_call.1} parent=1 // pred_check
      _
    $region59: #{tpu_custom_call.1} parent=1 // pred_check_branch
      %2185 = sbr.rel (0) target = $region61
    $region60: #{tpu_custom_call.1} parent=1 // pred_region
      _
    $region61: #{tpu_custom_call.1} parent=1 // pred_fallthru
      _
    // Predicated region
    $region62: #{tpu_custom_call.1} parent=1 // pred_check
      _
    $region63: #{tpu_custom_call.1} parent=1 // pred_check_branch
      %2187 = sbr.rel (0) target = $region65
    $region64: #{tpu_custom_call.1} parent=1 // pred_region
      %2188 = dma.done [#allocation6], 16
    $region65: #{tpu_custom_call.1} parent=1 // pred_fallthru
      _
    %2189 = vsyncpa [#allocation5], 1
    %2190 = vsyncpa [#allocation6], 1

</llo_original>
